<compile_context>
chip_gen: v6e
topology: v6e:2x2x1
jax: 0.10.0
libtpu: 0.0.40
codegen_flags: <defaults>
</compile_context>

<pallas_src>
import jax
import jax.numpy as jnp
from jax import lax
from jax.experimental import pallas as pl
from jax.experimental.pallas import tpu as pltpu

LANE = 128


def _slow_rnn_kernel(x_ref, wih_ref, bias_ref, whh_ref, fcw_ref, fcb_ref, out_ref):
    """Whole SlowRNN forward in a single invocation (no grid).

    x_ref:    (T, B, I)  f32 VMEM  -- time-major input.
    wih_ref:  (I, Gp)    f32 VMEM  -- W_ih^T, each gate's columns zero-padded H -> Hp.
    bias_ref: (1, Gp)    f32 VMEM  -- b_ih + b_hh, gate-padded.
    whh_ref:  (Hp, Gp)   f32 VMEM  -- W_hh^T, contraction rows AND gate columns padded H -> Hp.
    fcw_ref:  (1, Hp)    f32 VMEM  -- fc weight, zero-padded H -> Hp.
    fcb_ref:  (1,)       f32 SMEM  -- fc bias scalar.
    out_ref:  (B, 1)     f32 VMEM  -- sigmoid(fc(h_T)).
    """
    T, B, _ = x_ref.shape
    Hp, Gp = whh_ref.shape

    wih = wih_ref[...]
    whh = whh_ref[...]
    bias = bias_ref[...]

    h = jnp.zeros((B, Hp), jnp.float32)
    c = jnp.zeros((B, Hp), jnp.float32)

    # Static Python loop (T small & static): fully unrolled, all indices constant, so the
    # LLO scheduler sees the whole serial chain (equivalent to fori_loop(unroll=True)).
    for t in range(T):
        # Input projection for this step has no recurrent dependency -> sits off the
        # serial critical path and overlaps with the recurrence.
        pre_t = jnp.dot(x_ref[t], wih, preferred_element_type=jnp.float32) + bias   # (B, Gp)
        # Serial part: full padded h feeds the MXU (no h[:, :H] lane slice); the zero
        # rows of whh keep the result exact because h's padded lanes are exactly 0.
        gates = pre_t + jnp.dot(h, whh, preferred_element_type=jnp.float32)         # (B, Gp)
        # PyTorch gate order i, f, g, o; each gate slice is a full 128-lane vreg block.
        i_g = jax.nn.sigmoid(gates[:, 0 * Hp:1 * Hp])
        f_g = jax.nn.sigmoid(gates[:, 1 * Hp:2 * Hp])
        g_g = jnp.tanh(gates[:, 2 * Hp:3 * Hp])
        o_g = jax.nn.sigmoid(gates[:, 3 * Hp:4 * Hp])
        c = f_g * c + i_g * g_g            # padded lanes stay exactly 0
        h = o_g * jnp.tanh(c)

    # Dropout is identity in eval mode; fc + sigmoid head.  fcw's padded lanes are 0, so
    # the lane reduce over Hp equals the reduce over the real H lanes.  One-off masked
    # (B, 1) store is fine (per review: lane-dense outputs matter per grid step, not once).
    logit = jnp.sum(h * fcw_ref[...], axis=-1, keepdims=True) + fcb_ref[0]           # (B, 1)
    out_ref[...] = jax.nn.sigmoid(logit)


def prepare_params(w_ih, w_hh, b_ih, b_hh, fc_w, fc_b):
    """One-time (outside jit) padding of SlowRNN parameters to the TPU lane layout."""
    four_h, _ = w_ih.shape
    H = four_h // 4
    Hp = ((H + LANE - 1) // LANE) * LANE
    pad = Hp - H

    # W_ih^T with each gate's output columns padded H -> Hp (K stays = input_size).
    wih_p = jnp.pad(w_ih.T.reshape(-1, 4, H).astype(jnp.float32),
                    ((0, 0), (0, 0), (0, pad))).reshape(-1, 4 * Hp)
    # Combined bias, gate-padded, as a (1, Gp) row.
    bias_p = jnp.pad((b_ih + b_hh).reshape(4, H).astype(jnp.float32),
                     ((0, 0), (0, pad))).reshape(1, 4 * Hp)
    # W_hh^T with contraction rows padded H -> Hp (zero rows) and gate columns padded.
    whh_p = jnp.pad(w_hh.T.reshape(H, 4, H).astype(jnp.float32),
                    ((0, pad), (0, 0), (0, pad))).reshape(Hp, 4 * Hp)
    # fc head: weight padded to a full lane block; bias kept as a scalar for SMEM.
    fcw_p = jnp.pad(fc_w.astype(jnp.float32), ((0, 0), (0, pad)))        # (1, Hp)
    fcb = fc_b.astype(jnp.float32)                                       # (1,)
    return wih_p, bias_p, whh_p, fcw_p, fcb


@jax.jit
def slow_rnn_forward(x, wih_p, bias_p, whh_p, fcw_p, fcb):
    """x: (B, T, I) float32 (batch_first, like the PyTorch module). Returns (B, 1)."""
    B, T, I = x.shape
    # Only per-call HLO besides the custom call: a 128-byte transpose to time-major so the
    # kernel can use robust leading-dim indexing (x_ref[t]) inside the unrolled loop.
    x_tm = jnp.transpose(x, (1, 0, 2))
    return pl.pallas_call(
        _slow_rnn_kernel,
        out_shape=jax.ShapeDtypeStruct((B, 1), jnp.float32),
        in_specs=[
            pl.BlockSpec(memory_space=pltpu.MemorySpace.VMEM),   # x (time-major)
            pl.BlockSpec(memory_space=pltpu.MemorySpace.VMEM),   # W_ih^T (gate-padded)
            pl.BlockSpec(memory_space=pltpu.MemorySpace.VMEM),   # b_ih + b_hh (gate-padded)
            pl.BlockSpec(memory_space=pltpu.MemorySpace.VMEM),   # W_hh^T (K- and gate-padded)
            pl.BlockSpec(memory_space=pltpu.MemorySpace.VMEM),   # fc weight (padded)
            pl.BlockSpec(memory_space=pltpu.MemorySpace.SMEM),   # fc bias scalar
        ],
        out_specs=pl.BlockSpec(memory_space=pltpu.MemorySpace.VMEM),
    )(x_tm, wih_p, bias_p, whh_p, fcw_p, fcb)


def _reference_forward(x, w_ih, w_hh, b_ih, b_hh, fc_w, fc_b):
    """Pure-JAX reference (lax.scan LSTM), matches PyTorch nn.LSTM semantics."""
    B, T, I = x.shape
    H = w_hh.shape[1]

    def step(carry, x_t):
        h, c = carry
        gates = x_t @ w_ih.T + h @ w_hh.T + b_ih + b_hh
        i = jax.nn.sigmoid(gates[:, 0 * H:1 * H])
        f = jax.nn.sigmoid(gates[:, 1 * H:2 * H])
        g = jnp.tanh(gates[:, 2 * H:3 * H])
        o = jax.nn.sigmoid(gates[:, 3 * H:4 * H])
        c = f * c + i * g
        h = o * jnp.tanh(c)
        return (h, c), h

    h0 = jnp.zeros((B, H), jnp.float32)
    c0 = jnp.zeros((B, H), jnp.float32)
    (h_last, _), _ = lax.scan(step, (h0, c0), jnp.transpose(x, (1, 0, 2)))
    return jax.nn.sigmoid(h_last @ fc_w.T + fc_b)


if __name__ == "__main__":
    # Module hyperparameters (from SlowRNN.__init__ defaults).
    INPUT_SIZE = 2
    HIDDEN_SIZE = 16
    BATCH = 2
    SEQ = 8

    key = jax.random.PRNGKey(0)
    ks = jax.random.split(key, 7)
    k_scale = 1.0 / jnp.sqrt(HIDDEN_SIZE)

    # Deterministic parameters with PyTorch nn.LSTM / nn.Linear shapes.
    w_ih = jax.random.uniform(ks[0], (4 * HIDDEN_SIZE, INPUT_SIZE), jnp.float32, -k_scale, k_scale)
    w_hh = jax.random.uniform(ks[1], (4 * HIDDEN_SIZE, HIDDEN_SIZE), jnp.float32, -k_scale, k_scale)
    b_ih = jax.random.uniform(ks[2], (4 * HIDDEN_SIZE,), jnp.float32, -k_scale, k_scale)
    b_hh = jax.random.uniform(ks[3], (4 * HIDDEN_SIZE,), jnp.float32, -k_scale, k_scale)
    fc_w = jax.random.uniform(ks[4], (1, HIDDEN_SIZE), jnp.float32, -k_scale, k_scale)
    fc_b = jax.random.uniform(ks[5], (1,), jnp.float32, -k_scale, k_scale)

    x = jax.random.normal(ks[6], (BATCH, SEQ, INPUT_SIZE), jnp.float32)

    # One-time weight preparation (outside the jitted forward, per perf review).
    params = prepare_params(w_ih, w_hh, b_ih, b_hh, fc_w, fc_b)
    params = jax.tree_util.tree_map(jax.block_until_ready, params)

    out = jax.block_until_ready(slow_rnn_forward(x, *params))
    ref = _reference_forward(x, w_ih, w_hh, b_ih, b_hh, fc_w, fc_b)

    assert out.shape == (BATCH, 1), out.shape
    assert jnp.allclose(out, ref, atol=1e-5, rtol=1e-5), (out, ref)

    print("KERNEL_OK")
</pallas_src>

<mosaic_0001>
module attributes {stable_mosaic.version = 11 : i64} {
  func.func @_slow_rnn_kernel(%arg0: memref<8x2x2xf32, #tpu.memory_space<vmem>>, %arg1: memref<2x512xf32, #tpu.memory_space<vmem>>, %arg2: memref<1x512xf32, #tpu.memory_space<vmem>>, %arg3: memref<128x512xf32, #tpu.memory_space<vmem>>, %arg4: memref<1x128xf32, #tpu.memory_space<vmem>>, %arg5: memref<1xf32, #tpu.memory_space<smem>>, %arg6: memref<2x1xf32, #tpu.memory_space<vmem>>) attributes {dimension_semantics = [], scalar_prefetch = 0 : i64, scratch_operands = 0 : i64, tpu.core_type = #tpu.core_type<tc>} {
    %c0 = arith.constant 0 : index
    %c0_0 = arith.constant 0 : index
    %0 = vector.load %arg1[%c0, %c0_0] : memref<2x512xf32, #tpu.memory_space<vmem>>, vector<2x512xf32>
    %c0_1 = arith.constant 0 : index
    %c0_2 = arith.constant 0 : index
    %1 = vector.load %arg3[%c0_1, %c0_2] : memref<128x512xf32, #tpu.memory_space<vmem>>, vector<128x512xf32>
    %c0_3 = arith.constant 0 : index
    %c0_4 = arith.constant 0 : index
    %2 = vector.load %arg2[%c0_3, %c0_4] : memref<1x512xf32, #tpu.memory_space<vmem>>, vector<1x512xf32>
    %cst = arith.constant 0.000000e+00 : f32
    %3 = vector.broadcast %cst : f32 to vector<2x128xf32>
    %cst_5 = arith.constant 0.000000e+00 : f32
    %4 = vector.broadcast %cst_5 : f32 to vector<2x128xf32>
    %c0_6 = arith.constant 0 : index
    %c0_7 = arith.constant 0 : index
    %c0_8 = arith.constant 0 : index
    %5 = vector.load %arg0[%c0_6, %c0_7, %c0_8] : memref<8x2x2xf32, #tpu.memory_space<vmem>>, vector<1x2x2xf32>
    %6 = vector.shape_cast %5 : vector<1x2x2xf32> to vector<2x2xf32>
    %cst_9 = arith.constant dense<0.000000e+00> : vector<2x512xf32>
    %7 = tpu.matmul %6, %0, %cst_9 {dimension_numbers = #tpu.dot_dimension_numbers<[1], [0], [0], [1], [0, 0, 1, 1], [], []>} : vector<2x2xf32>, vector<2x512xf32>, vector<2x512xf32> -> vector<2x512xf32>
    %8 = vector.broadcast %2 : vector<1x512xf32> to vector<2x512xf32>
    %9 = arith.addf %7, %8 : vector<2x512xf32>
    %cst_10 = arith.constant dense<0.000000e+00> : vector<2x512xf32>
    %10 = tpu.matmul %3, %1, %cst_10 {dimension_numbers = #tpu.dot_dimension_numbers<[1], [0], [0], [1], [0, 0, 1, 1], [], []>} : vector<2x128xf32>, vector<128x512xf32>, vector<2x512xf32> -> vector<2x512xf32>
    %11 = arith.addf %9, %10 : vector<2x512xf32>
    %12 = vector.extract_strided_slice %11 {offsets = [0, 0], sizes = [2, 128], strides = [1, 1]} : vector<2x512xf32> to vector<2x128xf32>
    %13 = arith.negf %12 : vector<2x128xf32>
    %14 = math.exp %13 : vector<2x128xf32>
    %cst_11 = arith.constant 1.000000e+00 : f32
    %15 = vector.broadcast %cst_11 : f32 to vector<2x128xf32>
    %16 = arith.addf %15, %14 : vector<2x128xf32>
    %17 = arith.divf %15, %16 : vector<2x128xf32>
    %18 = vector.extract_strided_slice %11 {offsets = [0, 128], sizes = [2, 128], strides = [1, 1]} : vector<2x512xf32> to vector<2x128xf32>
    %19 = arith.negf %18 : vector<2x128xf32>
    %20 = math.exp %19 : vector<2x128xf32>
    %cst_12 = arith.constant 1.000000e+00 : f32
    %21 = vector.broadcast %cst_12 : f32 to vector<2x128xf32>
    %22 = arith.addf %21, %20 : vector<2x128xf32>
    %23 = arith.divf %21, %22 : vector<2x128xf32>
    %24 = vector.extract_strided_slice %11 {offsets = [0, 256], sizes = [2, 128], strides = [1, 1]} : vector<2x512xf32> to vector<2x128xf32>
    %25 = math.tanh %24 : vector<2x128xf32>
    %26 = vector.extract_strided_slice %11 {offsets = [0, 384], sizes = [2, 128], strides = [1, 1]} : vector<2x512xf32> to vector<2x128xf32>
    %27 = arith.negf %26 : vector<2x128xf32>
    %28 = math.exp %27 : vector<2x128xf32>
    %cst_13 = arith.constant 1.000000e+00 : f32
    %29 = vector.broadcast %cst_13 : f32 to vector<2x128xf32>
    %30 = arith.addf %29, %28 : vector<2x128xf32>
    %31 = arith.divf %29, %30 : vector<2x128xf32>
    %32 = arith.mulf %23, %4 : vector<2x128xf32>
    %33 = arith.mulf %17, %25 : vector<2x128xf32>
    %34 = arith.addf %32, %33 : vector<2x128xf32>
    %35 = math.tanh %34 : vector<2x128xf32>
    %36 = arith.mulf %31, %35 : vector<2x128xf32>
    %c1 = arith.constant 1 : index
    %c0_14 = arith.constant 0 : index
    %c0_15 = arith.constant 0 : index
    %37 = vector.load %arg0[%c1, %c0_14, %c0_15] : memref<8x2x2xf32, #tpu.memory_space<vmem>>, vector<1x2x2xf32>
    %38 = vector.shape_cast %37 : vector<1x2x2xf32> to vector<2x2xf32>
    %cst_16 = arith.constant dense<0.000000e+00> : vector<2x512xf32>
    %39 = tpu.matmul %38, %0, %cst_16 {dimension_numbers = #tpu.dot_dimension_numbers<[1], [0], [0], [1], [0, 0, 1, 1], [], []>} : vector<2x2xf32>, vector<2x512xf32>, vector<2x512xf32> -> vector<2x512xf32>
    %40 = vector.broadcast %2 : vector<1x512xf32> to vector<2x512xf32>
    %41 = arith.addf %39, %40 : vector<2x512xf32>
    %cst_17 = arith.constant dense<0.000000e+00> : vector<2x512xf32>
    %42 = tpu.matmul %36, %1, %cst_17 {dimension_numbers = #tpu.dot_dimension_numbers<[1], [0], [0], [1], [0, 0, 1, 1], [], []>} : vector<2x128xf32>, vector<128x512xf32>, vector<2x512xf32> -> vector<2x512xf32>
    %43 = arith.addf %41, %42 : vector<2x512xf32>
    %44 = vector.extract_strided_slice %43 {offsets = [0, 0], sizes = [2, 128], strides = [1, 1]} : vector<2x512xf32> to vector<2x128xf32>
    %45 = arith.negf %44 : vector<2x128xf32>
    %46 = math.exp %45 : vector<2x128xf32>
    %cst_18 = arith.constant 1.000000e+00 : f32
    %47 = vector.broadcast %cst_18 : f32 to vector<2x128xf32>
    %48 = arith.addf %47, %46 : vector<2x128xf32>
    %49 = arith.divf %47, %48 : vector<2x128xf32>
    %50 = vector.extract_strided_slice %43 {offsets = [0, 128], sizes = [2, 128], strides = [1, 1]} : vector<2x512xf32> to vector<2x128xf32>
    %51 = arith.negf %50 : vector<2x128xf32>
    %52 = math.exp %51 : vector<2x128xf32>
    %cst_19 = arith.constant 1.000000e+00 : f32
    %53 = vector.broadcast %cst_19 : f32 to vector<2x128xf32>
    %54 = arith.addf %53, %52 : vector<2x128xf32>
    %55 = arith.divf %53, %54 : vector<2x128xf32>
    %56 = vector.extract_strided_slice %43 {offsets = [0, 256], sizes = [2, 128], strides = [1, 1]} : vector<2x512xf32> to vector<2x128xf32>
    %57 = math.tanh %56 : vector<2x128xf32>
    %58 = vector.extract_strided_slice %43 {offsets = [0, 384], sizes = [2, 128], strides = [1, 1]} : vector<2x512xf32> to vector<2x128xf32>
    %59 = arith.negf %58 : vector<2x128xf32>
    %60 = math.exp %59 : vector<2x128xf32>
    %cst_20 = arith.constant 1.000000e+00 : f32
    %61 = vector.broadcast %cst_20 : f32 to vector<2x128xf32>
    %62 = arith.addf %61, %60 : vector<2x128xf32>
    %63 = arith.divf %61, %62 : vector<2x128xf32>
    %64 = arith.mulf %55, %34 : vector<2x128xf32>
    %65 = arith.mulf %49, %57 : vector<2x128xf32>
    %66 = arith.addf %64, %65 : vector<2x128xf32>
    %67 = math.tanh %66 : vector<2x128xf32>
    %68 = arith.mulf %63, %67 : vector<2x128xf32>
    %c2 = arith.constant 2 : index
    %c0_21 = arith.constant 0 : index
    %c0_22 = arith.constant 0 : index
    %69 = vector.load %arg0[%c2, %c0_21, %c0_22] : memref<8x2x2xf32, #tpu.memory_space<vmem>>, vector<1x2x2xf32>
    %70 = vector.shape_cast %69 : vector<1x2x2xf32> to vector<2x2xf32>
    %cst_23 = arith.constant dense<0.000000e+00> : vector<2x512xf32>
    %71 = tpu.matmul %70, %0, %cst_23 {dimension_numbers = #tpu.dot_dimension_numbers<[1], [0], [0], [1], [0, 0, 1, 1], [], []>} : vector<2x2xf32>, vector<2x512xf32>, vector<2x512xf32> -> vector<2x512xf32>
    %72 = vector.broadcast %2 : vector<1x512xf32> to vector<2x512xf32>
    %73 = arith.addf %71, %72 : vector<2x512xf32>
    %cst_24 = arith.constant dense<0.000000e+00> : vector<2x512xf32>
    %74 = tpu.matmul %68, %1, %cst_24 {dimension_numbers = #tpu.dot_dimension_numbers<[1], [0], [0], [1], [0, 0, 1, 1], [], []>} : vector<2x128xf32>, vector<128x512xf32>, vector<2x512xf32> -> vector<2x512xf32>
    %75 = arith.addf %73, %74 : vector<2x512xf32>
    %76 = vector.extract_strided_slice %75 {offsets = [0, 0], sizes = [2, 128], strides = [1, 1]} : vector<2x512xf32> to vector<2x128xf32>
    %77 = arith.negf %76 : vector<2x128xf32>
    %78 = math.exp %77 : vector<2x128xf32>
    %cst_25 = arith.constant 1.000000e+00 : f32
    %79 = vector.broadcast %cst_25 : f32 to vector<2x128xf32>
    %80 = arith.addf %79, %78 : vector<2x128xf32>
    %81 = arith.divf %79, %80 : vector<2x128xf32>
    %82 = vector.extract_strided_slice %75 {offsets = [0, 128], sizes = [2, 128], strides = [1, 1]} : vector<2x512xf32> to vector<2x128xf32>
    %83 = arith.negf %82 : vector<2x128xf32>
    %84 = math.exp %83 : vector<2x128xf32>
    %cst_26 = arith.constant 1.000000e+00 : f32
    %85 = vector.broadcast %cst_26 : f32 to vector<2x128xf32>
    %86 = arith.addf %85, %84 : vector<2x128xf32>
    %87 = arith.divf %85, %86 : vector<2x128xf32>
    %88 = vector.extract_strided_slice %75 {offsets = [0, 256], sizes = [2, 128], strides = [1, 1]} : vector<2x512xf32> to vector<2x128xf32>
    %89 = math.tanh %88 : vector<2x128xf32>
    %90 = vector.extract_strided_slice %75 {offsets = [0, 384], sizes = [2, 128], strides = [1, 1]} : vector<2x512xf32> to vector<2x128xf32>
    %91 = arith.negf %90 : vector<2x128xf32>
    %92 = math.exp %91 : vector<2x128xf32>
    %cst_27 = arith.constant 1.000000e+00 : f32
    %93 = vector.broadcast %cst_27 : f32 to vector<2x128xf32>
    %94 = arith.addf %93, %92 : vector<2x128xf32>
    %95 = arith.divf %93, %94 : vector<2x128xf32>
    %96 = arith.mulf %87, %66 : vector<2x128xf32>
    %97 = arith.mulf %81, %89 : vector<2x128xf32>
    %98 = arith.addf %96, %97 : vector<2x128xf32>
    %99 = math.tanh %98 : vector<2x128xf32>
    %100 = arith.mulf %95, %99 : vector<2x128xf32>
    %c3 = arith.constant 3 : index
    %c0_28 = arith.constant 0 : index
    %c0_29 = arith.constant 0 : index
    %101 = vector.load %arg0[%c3, %c0_28, %c0_29] : memref<8x2x2xf32, #tpu.memory_space<vmem>>, vector<1x2x2xf32>
    %102 = vector.shape_cast %101 : vector<1x2x2xf32> to vector<2x2xf32>
    %cst_30 = arith.constant dense<0.000000e+00> : vector<2x512xf32>
    %103 = tpu.matmul %102, %0, %cst_30 {dimension_numbers = #tpu.dot_dimension_numbers<[1], [0], [0], [1], [0, 0, 1, 1], [], []>} : vector<2x2xf32>, vector<2x512xf32>, vector<2x512xf32> -> vector<2x512xf32>
    %104 = vector.broadcast %2 : vector<1x512xf32> to vector<2x512xf32>
    %105 = arith.addf %103, %104 : vector<2x512xf32>
    %cst_31 = arith.constant dense<0.000000e+00> : vector<2x512xf32>
    %106 = tpu.matmul %100, %1, %cst_31 {dimension_numbers = #tpu.dot_dimension_numbers<[1], [0], [0], [1], [0, 0, 1, 1], [], []>} : vector<2x128xf32>, vector<128x512xf32>, vector<2x512xf32> -> vector<2x512xf32>
    %107 = arith.addf %105, %106 : vector<2x512xf32>
    %108 = vector.extract_strided_slice %107 {offsets = [0, 0], sizes = [2, 128], strides = [1, 1]} : vector<2x512xf32> to vector<2x128xf32>
    %109 = arith.negf %108 : vector<2x128xf32>
    %110 = math.exp %109 : vector<2x128xf32>
    %cst_32 = arith.constant 1.000000e+00 : f32
    %111 = vector.broadcast %cst_32 : f32 to vector<2x128xf32>
    %112 = arith.addf %111, %110 : vector<2x128xf32>
    %113 = arith.divf %111, %112 : vector<2x128xf32>
    %114 = vector.extract_strided_slice %107 {offsets = [0, 128], sizes = [2, 128], strides = [1, 1]} : vector<2x512xf32> to vector<2x128xf32>
    %115 = arith.negf %114 : vector<2x128xf32>
    %116 = math.exp %115 : vector<2x128xf32>
    %cst_33 = arith.constant 1.000000e+00 : f32
    %117 = vector.broadcast %cst_33 : f32 to vector<2x128xf32>
    %118 = arith.addf %117, %116 : vector<2x128xf32>
    %119 = arith.divf %117, %118 : vector<2x128xf32>
    %120 = vector.extract_strided_slice %107 {offsets = [0, 256], sizes = [2, 128], strides = [1, 1]} : vector<2x512xf32> to vector<2x128xf32>
    %121 = math.tanh %120 : vector<2x128xf32>
    %122 = vector.extract_strided_slice %107 {offsets = [0, 384], sizes = [2, 128], strides = [1, 1]} : vector<2x512xf32> to vector<2x128xf32>
    %123 = arith.negf %122 : vector<2x128xf32>
    %124 = math.exp %123 : vector<2x128xf32>
    %cst_34 = arith.constant 1.000000e+00 : f32
    %125 = vector.broadcast %cst_34 : f32 to vector<2x128xf32>
    %126 = arith.addf %125, %124 : vector<2x128xf32>
    %127 = arith.divf %125, %126 : vector<2x128xf32>
    %128 = arith.mulf %119, %98 : vector<2x128xf32>
    %129 = arith.mulf %113, %121 : vector<2x128xf32>
    %130 = arith.addf %128, %129 : vector<2x128xf32>
    %131 = math.tanh %130 : vector<2x128xf32>
    %132 = arith.mulf %127, %131 : vector<2x128xf32>
    %c4 = arith.constant 4 : index
    %c0_35 = arith.constant 0 : index
    %c0_36 = arith.constant 0 : index
    %133 = vector.load %arg0[%c4, %c0_35, %c0_36] : memref<8x2x2xf32, #tpu.memory_space<vmem>>, vector<1x2x2xf32>
    %134 = vector.shape_cast %133 : vector<1x2x2xf32> to vector<2x2xf32>
    %cst_37 = arith.constant dense<0.000000e+00> : vector<2x512xf32>
    %135 = tpu.matmul %134, %0, %cst_37 {dimension_numbers = #tpu.dot_dimension_numbers<[1], [0], [0], [1], [0, 0, 1, 1], [], []>} : vector<2x2xf32>, vector<2x512xf32>, vector<2x512xf32> -> vector<2x512xf32>
    %136 = vector.broadcast %2 : vector<1x512xf32> to vector<2x512xf32>
    %137 = arith.addf %135, %136 : vector<2x512xf32>
    %cst_38 = arith.constant dense<0.000000e+00> : vector<2x512xf32>
    %138 = tpu.matmul %132, %1, %cst_38 {dimension_numbers = #tpu.dot_dimension_numbers<[1], [0], [0], [1], [0, 0, 1, 1], [], []>} : vector<2x128xf32>, vector<128x512xf32>, vector<2x512xf32> -> vector<2x512xf32>
    %139 = arith.addf %137, %138 : vector<2x512xf32>
    %140 = vector.extract_strided_slice %139 {offsets = [0, 0], sizes = [2, 128], strides = [1, 1]} : vector<2x512xf32> to vector<2x128xf32>
    %141 = arith.negf %140 : vector<2x128xf32>
    %142 = math.exp %141 : vector<2x128xf32>
    %cst_39 = arith.constant 1.000000e+00 : f32
    %143 = vector.broadcast %cst_39 : f32 to vector<2x128xf32>
    %144 = arith.addf %143, %142 : vector<2x128xf32>
    %145 = arith.divf %143, %144 : vector<2x128xf32>
    %146 = vector.extract_strided_slice %139 {offsets = [0, 128], sizes = [2, 128], strides = [1, 1]} : vector<2x512xf32> to vector<2x128xf32>
    %147 = arith.negf %146 : vector<2x128xf32>
    %148 = math.exp %147 : vector<2x128xf32>
    %cst_40 = arith.constant 1.000000e+00 : f32
    %149 = vector.broadcast %cst_40 : f32 to vector<2x128xf32>
    %150 = arith.addf %149, %148 : vector<2x128xf32>
    %151 = arith.divf %149, %150 : vector<2x128xf32>
    %152 = vector.extract_strided_slice %139 {offsets = [0, 256], sizes = [2, 128], strides = [1, 1]} : vector<2x512xf32> to vector<2x128xf32>
    %153 = math.tanh %152 : vector<2x128xf32>
    %154 = vector.extract_strided_slice %139 {offsets = [0, 384], sizes = [2, 128], strides = [1, 1]} : vector<2x512xf32> to vector<2x128xf32>
    %155 = arith.negf %154 : vector<2x128xf32>
    %156 = math.exp %155 : vector<2x128xf32>
    %cst_41 = arith.constant 1.000000e+00 : f32
    %157 = vector.broadcast %cst_41 : f32 to vector<2x128xf32>
    %158 = arith.addf %157, %156 : vector<2x128xf32>
    %159 = arith.divf %157, %158 : vector<2x128xf32>
    %160 = arith.mulf %151, %130 : vector<2x128xf32>
    %161 = arith.mulf %145, %153 : vector<2x128xf32>
    %162 = arith.addf %160, %161 : vector<2x128xf32>
    %163 = math.tanh %162 : vector<2x128xf32>
    %164 = arith.mulf %159, %163 : vector<2x128xf32>
    %c5 = arith.constant 5 : index
    %c0_42 = arith.constant 0 : index
    %c0_43 = arith.constant 0 : index
    %165 = vector.load %arg0[%c5, %c0_42, %c0_43] : memref<8x2x2xf32, #tpu.memory_space<vmem>>, vector<1x2x2xf32>
    %166 = vector.shape_cast %165 : vector<1x2x2xf32> to vector<2x2xf32>
    %cst_44 = arith.constant dense<0.000000e+00> : vector<2x512xf32>
    %167 = tpu.matmul %166, %0, %cst_44 {dimension_numbers = #tpu.dot_dimension_numbers<[1], [0], [0], [1], [0, 0, 1, 1], [], []>} : vector<2x2xf32>, vector<2x512xf32>, vector<2x512xf32> -> vector<2x512xf32>
    %168 = vector.broadcast %2 : vector<1x512xf32> to vector<2x512xf32>
    %169 = arith.addf %167, %168 : vector<2x512xf32>
    %cst_45 = arith.constant dense<0.000000e+00> : vector<2x512xf32>
    %170 = tpu.matmul %164, %1, %cst_45 {dimension_numbers = #tpu.dot_dimension_numbers<[1], [0], [0], [1], [0, 0, 1, 1], [], []>} : vector<2x128xf32>, vector<128x512xf32>, vector<2x512xf32> -> vector<2x512xf32>
    %171 = arith.addf %169, %170 : vector<2x512xf32>
    %172 = vector.extract_strided_slice %171 {offsets = [0, 0], sizes = [2, 128], strides = [1, 1]} : vector<2x512xf32> to vector<2x128xf32>
    %173 = arith.negf %172 : vector<2x128xf32>
    %174 = math.exp %173 : vector<2x128xf32>
    %cst_46 = arith.constant 1.000000e+00 : f32
    %175 = vector.broadcast %cst_46 : f32 to vector<2x128xf32>
    %176 = arith.addf %175, %174 : vector<2x128xf32>
    %177 = arith.divf %175, %176 : vector<2x128xf32>
    %178 = vector.extract_strided_slice %171 {offsets = [0, 128], sizes = [2, 128], strides = [1, 1]} : vector<2x512xf32> to vector<2x128xf32>
    %179 = arith.negf %178 : vector<2x128xf32>
    %180 = math.exp %179 : vector<2x128xf32>
    %cst_47 = arith.constant 1.000000e+00 : f32
    %181 = vector.broadcast %cst_47 : f32 to vector<2x128xf32>
    %182 = arith.addf %181, %180 : vector<2x128xf32>
    %183 = arith.divf %181, %182 : vector<2x128xf32>
    %184 = vector.extract_strided_slice %171 {offsets = [0, 256], sizes = [2, 128], strides = [1, 1]} : vector<2x512xf32> to vector<2x128xf32>
    %185 = math.tanh %184 : vector<2x128xf32>
    %186 = vector.extract_strided_slice %171 {offsets = [0, 384], sizes = [2, 128], strides = [1, 1]} : vector<2x512xf32> to vector<2x128xf32>
    %187 = arith.negf %186 : vector<2x128xf32>
    %188 = math.exp %187 : vector<2x128xf32>
    %cst_48 = arith.constant 1.000000e+00 : f32
    %189 = vector.broadcast %cst_48 : f32 to vector<2x128xf32>
    %190 = arith.addf %189, %188 : vector<2x128xf32>
    %191 = arith.divf %189, %190 : vector<2x128xf32>
    %192 = arith.mulf %183, %162 : vector<2x128xf32>
    %193 = arith.mulf %177, %185 : vector<2x128xf32>
    %194 = arith.addf %192, %193 : vector<2x128xf32>
    %195 = math.tanh %194 : vector<2x128xf32>
    %196 = arith.mulf %191, %195 : vector<2x128xf32>
    %c6 = arith.constant 6 : index
    %c0_49 = arith.constant 0 : index
    %c0_50 = arith.constant 0 : index
    %197 = vector.load %arg0[%c6, %c0_49, %c0_50] : memref<8x2x2xf32, #tpu.memory_space<vmem>>, vector<1x2x2xf32>
    %198 = vector.shape_cast %197 : vector<1x2x2xf32> to vector<2x2xf32>
    %cst_51 = arith.constant dense<0.000000e+00> : vector<2x512xf32>
    %199 = tpu.matmul %198, %0, %cst_51 {dimension_numbers = #tpu.dot_dimension_numbers<[1], [0], [0], [1], [0, 0, 1, 1], [], []>} : vector<2x2xf32>, vector<2x512xf32>, vector<2x512xf32> -> vector<2x512xf32>
    %200 = vector.broadcast %2 : vector<1x512xf32> to vector<2x512xf32>
    %201 = arith.addf %199, %200 : vector<2x512xf32>
    %cst_52 = arith.constant dense<0.000000e+00> : vector<2x512xf32>
    %202 = tpu.matmul %196, %1, %cst_52 {dimension_numbers = #tpu.dot_dimension_numbers<[1], [0], [0], [1], [0, 0, 1, 1], [], []>} : vector<2x128xf32>, vector<128x512xf32>, vector<2x512xf32> -> vector<2x512xf32>
    %203 = arith.addf %201, %202 : vector<2x512xf32>
    %204 = vector.extract_strided_slice %203 {offsets = [0, 0], sizes = [2, 128], strides = [1, 1]} : vector<2x512xf32> to vector<2x128xf32>
    %205 = arith.negf %204 : vector<2x128xf32>
    %206 = math.exp %205 : vector<2x128xf32>
    %cst_53 = arith.constant 1.000000e+00 : f32
    %207 = vector.broadcast %cst_53 : f32 to vector<2x128xf32>
    %208 = arith.addf %207, %206 : vector<2x128xf32>
    %209 = arith.divf %207, %208 : vector<2x128xf32>
    %210 = vector.extract_strided_slice %203 {offsets = [0, 128], sizes = [2, 128], strides = [1, 1]} : vector<2x512xf32> to vector<2x128xf32>
    %211 = arith.negf %210 : vector<2x128xf32>
    %212 = math.exp %211 : vector<2x128xf32>
    %cst_54 = arith.constant 1.000000e+00 : f32
    %213 = vector.broadcast %cst_54 : f32 to vector<2x128xf32>
    %214 = arith.addf %213, %212 : vector<2x128xf32>
    %215 = arith.divf %213, %214 : vector<2x128xf32>
    %216 = vector.extract_strided_slice %203 {offsets = [0, 256], sizes = [2, 128], strides = [1, 1]} : vector<2x512xf32> to vector<2x128xf32>
    %217 = math.tanh %216 : vector<2x128xf32>
    %218 = vector.extract_strided_slice %203 {offsets = [0, 384], sizes = [2, 128], strides = [1, 1]} : vector<2x512xf32> to vector<2x128xf32>
    %219 = arith.negf %218 : vector<2x128xf32>
    %220 = math.exp %219 : vector<2x128xf32>
    %cst_55 = arith.constant 1.000000e+00 : f32
    %221 = vector.broadcast %cst_55 : f32 to vector<2x128xf32>
    %222 = arith.addf %221, %220 : vector<2x128xf32>
    %223 = arith.divf %221, %222 : vector<2x128xf32>
    %224 = arith.mulf %215, %194 : vector<2x128xf32>
    %225 = arith.mulf %209, %217 : vector<2x128xf32>
    %226 = arith.addf %224, %225 : vector<2x128xf32>
    %227 = math.tanh %226 : vector<2x128xf32>
    %228 = arith.mulf %223, %227 : vector<2x128xf32>
    %c7 = arith.constant 7 : index
    %c0_56 = arith.constant 0 : index
    %c0_57 = arith.constant 0 : index
    %229 = vector.load %arg0[%c7, %c0_56, %c0_57] : memref<8x2x2xf32, #tpu.memory_space<vmem>>, vector<1x2x2xf32>
    %230 = vector.shape_cast %229 : vector<1x2x2xf32> to vector<2x2xf32>
    %cst_58 = arith.constant dense<0.000000e+00> : vector<2x512xf32>
    %231 = tpu.matmul %230, %0, %cst_58 {dimension_numbers = #tpu.dot_dimension_numbers<[1], [0], [0], [1], [0, 0, 1, 1], [], []>} : vector<2x2xf32>, vector<2x512xf32>, vector<2x512xf32> -> vector<2x512xf32>
    %232 = vector.broadcast %2 : vector<1x512xf32> to vector<2x512xf32>
    %233 = arith.addf %231, %232 : vector<2x512xf32>
    %cst_59 = arith.constant dense<0.000000e+00> : vector<2x512xf32>
    %234 = tpu.matmul %228, %1, %cst_59 {dimension_numbers = #tpu.dot_dimension_numbers<[1], [0], [0], [1], [0, 0, 1, 1], [], []>} : vector<2x128xf32>, vector<128x512xf32>, vector<2x512xf32> -> vector<2x512xf32>
    %235 = arith.addf %233, %234 : vector<2x512xf32>
    %236 = vector.extract_strided_slice %235 {offsets = [0, 0], sizes = [2, 128], strides = [1, 1]} : vector<2x512xf32> to vector<2x128xf32>
    %237 = arith.negf %236 : vector<2x128xf32>
    %238 = math.exp %237 : vector<2x128xf32>
    %cst_60 = arith.constant 1.000000e+00 : f32
    %239 = vector.broadcast %cst_60 : f32 to vector<2x128xf32>
    %240 = arith.addf %239, %238 : vector<2x128xf32>
    %241 = arith.divf %239, %240 : vector<2x128xf32>
    %242 = vector.extract_strided_slice %235 {offsets = [0, 128], sizes = [2, 128], strides = [1, 1]} : vector<2x512xf32> to vector<2x128xf32>
    %243 = arith.negf %242 : vector<2x128xf32>
    %244 = math.exp %243 : vector<2x128xf32>
    %cst_61 = arith.constant 1.000000e+00 : f32
    %245 = vector.broadcast %cst_61 : f32 to vector<2x128xf32>
    %246 = arith.addf %245, %244 : vector<2x128xf32>
    %247 = arith.divf %245, %246 : vector<2x128xf32>
    %248 = vector.extract_strided_slice %235 {offsets = [0, 256], sizes = [2, 128], strides = [1, 1]} : vector<2x512xf32> to vector<2x128xf32>
    %249 = math.tanh %248 : vector<2x128xf32>
    %250 = vector.extract_strided_slice %235 {offsets = [0, 384], sizes = [2, 128], strides = [1, 1]} : vector<2x512xf32> to vector<2x128xf32>
    %251 = arith.negf %250 : vector<2x128xf32>
    %252 = math.exp %251 : vector<2x128xf32>
    %cst_62 = arith.constant 1.000000e+00 : f32
    %253 = vector.broadcast %cst_62 : f32 to vector<2x128xf32>
    %254 = arith.addf %253, %252 : vector<2x128xf32>
    %255 = arith.divf %253, %254 : vector<2x128xf32>
    %256 = arith.mulf %247, %226 : vector<2x128xf32>
    %257 = arith.mulf %241, %249 : vector<2x128xf32>
    %258 = arith.addf %256, %257 : vector<2x128xf32>
    %259 = math.tanh %258 : vector<2x128xf32>
    %260 = arith.mulf %255, %259 : vector<2x128xf32>
    %c0_63 = arith.constant 0 : index
    %c0_64 = arith.constant 0 : index
    %261 = vector.load %arg4[%c0_63, %c0_64] : memref<1x128xf32, #tpu.memory_space<vmem>>, vector<1x128xf32>
    %262 = vector.broadcast %261 : vector<1x128xf32> to vector<2x128xf32>
    %263 = arith.mulf %260, %262 : vector<2x128xf32>
    %cst_65 = arith.constant dense<0.000000e+00> : vector<2xf32>
    %264 = vector.multi_reduction <add>, %263, %cst_65 [1] : vector<2x128xf32> to vector<2xf32>
    %265 = vector.shape_cast %264 : vector<2xf32> to vector<2x1xf32>
    %c0_66 = arith.constant 0 : index
    %266 = memref.load %arg5[%c0_66] : memref<1xf32, #tpu.memory_space<smem>>
    %267 = vector.broadcast %266 : f32 to vector<2x1xf32>
    %268 = arith.addf %265, %267 : vector<2x1xf32>
    %269 = arith.negf %268 : vector<2x1xf32>
    %270 = math.exp %269 : vector<2x1xf32>
    %cst_67 = arith.constant 1.000000e+00 : f32
    %271 = vector.broadcast %cst_67 : f32 to vector<2x1xf32>
    %272 = arith.addf %271, %270 : vector<2x1xf32>
    %273 = arith.divf %271, %272 : vector<2x1xf32>
    %c0_68 = arith.constant 0 : index
    %c0_69 = arith.constant 0 : index
    %274 = vector.load %arg6[%c0_68, %c0_69] : memref<2x1xf32, #tpu.memory_space<vmem>>, vector<2x1xf32>
    tpu.vector_store %arg6[%c0_68, %c0_69], %273 {strides = array<i32>} : memref<2x1xf32, #tpu.memory_space<vmem>>, vector<2x1xf32>,
    return
  }
}

</mosaic_0001>

<llo_original>
// kernel: slow_rnn_forward.1
$region0: #{slow_rnn_forward.1}
  #allocation0 [shape = 'u32[]', space=smem, size = 0x4, offset = 0x4, fixed_abs, tag = 'smem constant byte address 0x4 - core index']
  #allocation1 [shape = 'u32[144,128]{1,0:T(1,128)}', space=vmem, size = 0x12000, scoped, tag = 'internal scratch']
  #allocation2 [shape = 'f32[1]{0:T(128)S(6)}', space=smem, size = 0x200, scoped, tag = 'scoped memory for slow_rnn_forward.1']
  %s0 = inlined_call_operand.vmem [shape: f32[8,2,2], index: 0, kind: input, shape index: {}]
  %s1 = inlined_call_operand.vmem [shape: f32[2,512], index: 1, kind: input, shape index: {}]
  %s2 = inlined_call_operand.vmem [shape: f32[1,512], index: 2, kind: input, shape index: {}]
  %s3 = inlined_call_operand.hbm [shape: f32[128,512], index: 3, kind: input, shape index: {}]
  %s4 = inlined_call_operand.vmem [shape: f32[1,128], index: 4, kind: input, shape index: {}]
  %s5 = inlined_call_operand.<no memory space> [shape: f32[1], index: 5, kind: input, shape index: {}]
  %s6 = inlined_call_operand.vmem [shape: f32[2,1], index: 6, kind: output, shape index: {}]
  %s7 = sld [smem:[#allocation0]]
  $region38: #{slow_rnn_forward.1} parent=0
    _
  %s9 = ssub.s32 1, %s7
  %s10 = scalar_select 0, %s9, %s7
  %11 = sst [smem:[#allocation2]] %s5
  $region1: #{slow_rnn_forward.1} parent=0
    #allocation3 [shape = 'u8[262144]{0}', space=vmem, size = 0x40000, scoped, tag = 'input window, operand 3, single buffered']
    #allocation4 [shape = 's32[1]{0}', space=sflag, size = 0x4, scoped, tag = 'scoped memory for slow_rnn_forward.1']
    %12 = vsyncpa [#allocation4], 0
    // Predicated region
    $region2: #{slow_rnn_forward.1} parent=1 // pred_check
      _
    $region3: #{slow_rnn_forward.1} parent=1 // pred_check_branch
      %14 = sbr.rel (0) target = $region5
    $region4: #{slow_rnn_forward.1} parent=1 // pred_region
      _
    $region5: #{slow_rnn_forward.1} parent=1 // pred_fallthru
      _
    // Predicated region
    $region6: #{slow_rnn_forward.1} parent=1 // pred_check
      _
    $region7: #{slow_rnn_forward.1} parent=1 // pred_check_branch
      %16 = sbr.rel (0) target = $region9
    $region8: #{slow_rnn_forward.1} parent=1 // pred_region
      _
    $region9: #{slow_rnn_forward.1} parent=1 // pred_fallthru
      _
    // Predicated region
    $region10: #{slow_rnn_forward.1} parent=1 // pred_check
      _
    $region11: #{slow_rnn_forward.1} parent=1 // pred_check_branch
      %18 = sbr.rel (0) target = $region13
    $region12: #{slow_rnn_forward.1} parent=1 // pred_region
      _
    $region13: #{slow_rnn_forward.1} parent=1 // pred_fallthru
      _
    // Predicated region
    $region14: #{slow_rnn_forward.1} parent=1 // pred_check
      _
    $region15: #{slow_rnn_forward.1} parent=1 // pred_check_branch
      %20 = sbr.rel (0) target = $region17
    $region16: #{slow_rnn_forward.1} parent=1 // pred_region
      %s22 = ssub.s32 8192, 8192
      %23 = vsyncadd [#allocation4], %s22
      %s24 = sshll.u32 [#allocation3], 4
      %s25 = int_to_ptr.vmem [resolvable:$true] %s24
      %30 = dma.hbm_to_vmem [thread:$0]  %s3, 8192, %s25, [#allocation4], 512, 512, 32
    $region17: #{slow_rnn_forward.1} parent=1 // pred_fallthru
      _
    // Predicated region
    $region18: #{slow_rnn_forward.1} parent=1 // pred_check
      _
    $region19: #{slow_rnn_forward.1} parent=1 // pred_check_branch
      %32 = sbr.rel (0) target = $region21
    $region20: #{slow_rnn_forward.1} parent=1 // pred_region
      _
    $region21: #{slow_rnn_forward.1} parent=1 // pred_fallthru
      _
    // Predicated region
    $region22: #{slow_rnn_forward.1} parent=1 // pred_check
      _
    $region23: #{slow_rnn_forward.1} parent=1 // pred_check_branch
      %34 = sbr.rel (0) target = $region25
    $region24: #{slow_rnn_forward.1} parent=1 // pred_region
      _
    $region25: #{slow_rnn_forward.1} parent=1 // pred_fallthru
      _
    // Predicated region
    $region26: #{slow_rnn_forward.1} parent=1 // pred_check
      _
    $region27: #{slow_rnn_forward.1} parent=1 // pred_check_branch
      %36 = sbr.rel (0) target = $region29
    $region28: #{slow_rnn_forward.1} parent=1 // pred_region
      %37 = dma.done [#allocation4], 8192
    $region29: #{slow_rnn_forward.1} parent=1 // pred_fallthru
      _
    %v38 = vld [vmem:[%s1] sm:$0xff]
    %v39 = vld [vmem:[#allocation3] sm:$0xff]
    %v40 = vld [vmem:[#allocation3 + $0x8] sm:$0xff]
    %v41 = vld [vmem:[#allocation3 + $0x10] sm:$0xff]
    %v42 = vld [vmem:[#allocation3 + $0x18] sm:$0xff]
    %v43 = vld [vmem:[#allocation3 + $0x20] sm:$0xff]
    %v44 = vld [vmem:[#allocation3 + $0x28] sm:$0xff]
    %v45 = vld [vmem:[#allocation3 + $0x30] sm:$0xff]
    %v46 = vld [vmem:[#allocation3 + $0x38] sm:$0xff]
    %v47 = vld [vmem:[#allocation3 + $0x40] sm:$0xff]
    %v48 = vld [vmem:[#allocation3 + $0x48] sm:$0xff]
    %v49 = vld [vmem:[#allocation3 + $0x50] sm:$0xff]
    %v50 = vld [vmem:[#allocation3 + $0x58] sm:$0xff]
    %v51 = vld [vmem:[#allocation3 + $0x60] sm:$0xff]
    %v52 = vld [vmem:[#allocation3 + $0x68] sm:$0xff]
    %v53 = vld [vmem:[#allocation3 + $0x70] sm:$0xff]
    %v54 = vld [vmem:[#allocation3 + $0x78] sm:$0xff]
    %v55 = vld [vmem:[#allocation3 + $0x80] sm:$0xff]
    %v56 = vld [vmem:[#allocation3 + $0x88] sm:$0xff]
    %v57 = vld [vmem:[#allocation3 + $0x90] sm:$0xff]
    %v58 = vld [vmem:[#allocation3 + $0x98] sm:$0xff]
    %v59 = vld [vmem:[#allocation3 + $0xa0] sm:$0xff]
    %v60 = vld [vmem:[#allocation3 + $0xa8] sm:$0xff]
    %v61 = vld [vmem:[#allocation3 + $0xb0] sm:$0xff]
    %v62 = vld [vmem:[#allocation3 + $0xb8] sm:$0xff]
    %v63 = vld [vmem:[#allocation3 + $0xc0] sm:$0xff]
    %v64 = vld [vmem:[#allocation3 + $0xc8] sm:$0xff]
    %v65 = vld [vmem:[#allocation3 + $0xd0] sm:$0xff]
    %v66 = vld [vmem:[#allocation3 + $0xd8] sm:$0xff]
    %v67 = vld [vmem:[#allocation3 + $0xe0] sm:$0xff]
    %v68 = vld [vmem:[#allocation3 + $0xe8] sm:$0xff]
    %v69 = vld [vmem:[#allocation3 + $0xf0] sm:$0xff]
    %v70 = vld [vmem:[#allocation3 + $0xf8] sm:$0xff]
    %v71 = vld [vmem:[#allocation3 + $0x100] sm:$0xff]
    %v72 = vld [vmem:[#allocation3 + $0x108] sm:$0xff]
    %v73 = vld [vmem:[#allocation3 + $0x110] sm:$0xff]
    %v74 = vld [vmem:[#allocation3 + $0x118] sm:$0xff]
    %v75 = vld [vmem:[#allocation3 + $0x120] sm:$0xff]
    %v76 = vld [vmem:[#allocation3 + $0x128] sm:$0xff]
    %v77 = vld [vmem:[#allocation3 + $0x130] sm:$0xff]
    %v78 = vld [vmem:[#allocation3 + $0x138] sm:$0xff]
    %v79 = vld [vmem:[#allocation3 + $0x140] sm:$0xff]
    %v80 = vld [vmem:[#allocation3 + $0x148] sm:$0xff]
    %v81 = vld [vmem:[#allocation3 + $0x150] sm:$0xff]
    %v82 = vld [vmem:[#allocation3 + $0x158] sm:$0xff]
    %v83 = vld [vmem:[#allocation3 + $0x160] sm:$0xff]
    %v84 = vld [vmem:[#allocation3 + $0x168] sm:$0xff]
    %v85 = vld [vmem:[#allocation3 + $0x170] sm:$0xff]
    %v86 = vld [vmem:[#allocation3 + $0x178] sm:$0xff]
    %v87 = vld [vmem:[#allocation3 + $0x180] sm:$0xff]
    %v88 = vld [vmem:[#allocation3 + $0x188] sm:$0xff]
    %v89 = vld [vmem:[#allocation3 + $0x190] sm:$0xff]
    %v90 = vld [vmem:[#allocation3 + $0x198] sm:$0xff]
    %v91 = vld [vmem:[#allocation3 + $0x1a0] sm:$0xff]
    %v92 = vld [vmem:[#allocation3 + $0x1a8] sm:$0xff]
    %v93 = vld [vmem:[#allocation3 + $0x1b0] sm:$0xff]
    %v94 = vld [vmem:[#allocation3 + $0x1b8] sm:$0xff]
    %v95 = vld [vmem:[#allocation3 + $0x1c0] sm:$0xff]
    %v96 = vld [vmem:[#allocation3 + $0x1c8] sm:$0xff]
    %v97 = vld [vmem:[#allocation3 + $0x1d0] sm:$0xff]
    %v98 = vld [vmem:[#allocation3 + $0x1d8] sm:$0xff]
    %v99 = vld [vmem:[#allocation3 + $0x1e0] sm:$0xff]
    %v100 = vld [vmem:[#allocation3 + $0x1e8] sm:$0xff]
    %v101 = vld [vmem:[#allocation3 + $0x1f0] sm:$0xff]
    %v102 = vld [vmem:[#allocation3 + $0x1f8] sm:$0xff]
    %v103 = vld [vmem:[%s2] sm:$0xf]
    %v104 = vld [vmem:[%s0] sm:$0x3]
    %v106 = vlaneseq
    %v107 = vshrl.u32 %v106, 7
    %v108 = vsub.s32 0, %v107
    %v109 = vrot.slane %v103, %v108
    %v110 = vlaneseq
    %v111 = vshrl.u32 %v110, 7
    %v112 = vsub.s32 1, %v111
    %v113 = vrot.slane %v103, %v112
    %v114 = vlaneseq
    %v115 = vshrl.u32 %v114, 7
    %v116 = vsub.s32 2, %v115
    %v117 = vrot.slane %v103, %v116
    %v118 = vlaneseq
    %v119 = vshrl.u32 %v118, 7
    %v120 = vsub.s32 3, %v119
    %v121 = vrot.slane %v103, %v120
    %v127 = vcombine.high %v38, %v38
    %v129 = vunpack.c.l.s4 1983009808
    %v130 = vunpack.c.0.s8 %v129
    %v131 = vlaneseq
    %v132 = vshrl.u32 %v131, 7
    %v133 = vsub.s32 %v130, %v132
    %v134 = vrot.slane %v38, %v133
    %v136 = vunpack.c.l.s4 1983009808
    %v137 = vunpack.c.0.s8 %v136
    %v138 = vlaneseq
    %v139 = vshrl.u32 %v138, 7
    %v140 = vsub.s32 %v137, %v139
    %v141 = vrot.slane %v127, %v140
    %v142 = vcombine.high %v134, %v134
    %v143 = vcombine.high %v141, %v141
    %vm144 = vcmask 15360
    %v146 = vsel %vm144, %v104, 0
    %vm148 = vcmask 1041408
    %v149 = vsel %vm148, %v134, 0
    %v151 = vsel %vm148, %v142, 0
    %v153 = vsel %vm148, %v141, 0
    %v155 = vsel %vm148, %v143, 0
    %157 = vmatprep.subr.mxu0 0.0
    %158 = vmatpush1.msra.mxu0 0.0
    %159 = vmatprep.subr.mxu0 0.0
    %160 = vmatpush1.msra.mxu0 0.0
    %161 = vmatprep.subr.mxu0 0.0
    %162 = vmatpush1.msra.mxu0 0.0
    %163 = vmatprep.subr.mxu0 0.0
    %164 = vmatpush1.msra.mxu0 0.0
    %165 = vmatprep.subr.mxu0 0.0
    %166 = vmatpush1.msra.mxu0 0.0
    %167 = vmatprep.subr.mxu0 0.0
    %168 = vmatpush1.msra.mxu0 0.0
    %169 = vmatprep.subr.mxu0 0.0
    %170 = vmatpush1.msra.mxu0 0.0
    %171 = vmatprep.subr.mxu0 0.0
    %172 = vmatpush1.msra.mxu0 0.0
    %173 = vmatprep.subr.mxu0 0.0
    %174 = vmatpush1.msra.mxu0 0.0
    %175 = vmatprep.subr.mxu0 0.0
    %176 = vmatpush1.msra.mxu0 0.0
    %177 = vmatprep.subr.mxu0 0.0
    %178 = vmatpush1.msra.mxu0 0.0
    %179 = vmatprep.subr.mxu0 0.0
    %180 = vmatpush1.msra.mxu0 0.0
    %181 = vmatprep.subr.mxu0 0.0
    %182 = vmatpush1.msra.mxu0 0.0
    %183 = vmatprep.subr.mxu0 0.0
    %184 = vmatpush1.msra.mxu0 0.0
    %185 = vmatprep.subr.mxu0 0.0
    %186 = vmatpush1.msra.mxu0 0.0
    %187 = vmatprep.subr.mxu0 %v151
    %188 = vmatpush1.msra.mxu0 %v149
    %189 = vmatprep.subr.mxu0 0.0
    %190 = vmatpush2.msra.mxu0 0.0
    %191 = vmatprep.subr.mxu0 0.0
    %192 = vmatpush2.msra.mxu0 0.0
    %193 = vmatprep.subr.mxu0 0.0
    %194 = vmatpush2.msra.mxu0 0.0
    %195 = vmatprep.subr.mxu0 0.0
    %196 = vmatpush2.msra.mxu0 0.0
    %197 = vmatprep.subr.mxu0 0.0
    %198 = vmatpush2.msra.mxu0 0.0
    %199 = vmatprep.subr.mxu0 0.0
    %200 = vmatpush2.msra.mxu0 0.0
    %201 = vmatprep.subr.mxu0 0.0
    %202 = vmatpush2.msra.mxu0 0.0
    %203 = vmatprep.subr.mxu0 0.0
    %204 = vmatpush2.msra.mxu0 0.0
    %205 = vmatprep.subr.mxu0 0.0
    %206 = vmatpush2.msra.mxu0 0.0
    %207 = vmatprep.subr.mxu0 0.0
    %208 = vmatpush2.msra.mxu0 0.0
    %209 = vmatprep.subr.mxu0 0.0
    %210 = vmatpush2.msra.mxu0 0.0
    %211 = vmatprep.subr.mxu0 0.0
    %212 = vmatpush2.msra.mxu0 0.0
    %213 = vmatprep.subr.mxu0 0.0
    %214 = vmatpush2.msra.mxu0 0.0
    %215 = vmatprep.subr.mxu0 0.0
    %216 = vmatpush2.msra.mxu0 0.0
    %217 = vmatprep.subr.mxu0 0.0
    %218 = vmatpush2.msra.mxu0 0.0
    %219 = vmatprep.subr.mxu0 0.0
    %220 = vmatpush2.msra.mxu0 0.0
    %221 = vmatprep.mubr.f32.mxu0 0.0
    %222 = vmatmul.mubr.f32.gmra.mxu0 %v146
    %v223 = vpop.f32.mrf.mxu0
    %v224 = vadd.f32 %v109, %v223
    %v225 = vpop.f32.mrf.mxu0
    %v226 = vadd.f32 %v113, %v225
    %227 = vdwg.mxu0
    %228 = vmatprep.subr.mxu0 0.0
    %229 = vmatpush1.msra.mxu0 0.0
    %230 = vmatprep.subr.mxu0 0.0
    %231 = vmatpush1.msra.mxu0 0.0
    %232 = vmatprep.subr.mxu0 0.0
    %233 = vmatpush1.msra.mxu0 0.0
    %234 = vmatprep.subr.mxu0 0.0
    %235 = vmatpush1.msra.mxu0 0.0
    %236 = vmatprep.subr.mxu0 0.0
    %237 = vmatpush1.msra.mxu0 0.0
    %238 = vmatprep.subr.mxu0 0.0
    %239 = vmatpush1.msra.mxu0 0.0
    %240 = vmatprep.subr.mxu0 0.0
    %241 = vmatpush1.msra.mxu0 0.0
    %242 = vmatprep.subr.mxu0 0.0
    %243 = vmatpush1.msra.mxu0 0.0
    %244 = vmatprep.subr.mxu0 0.0
    %245 = vmatpush1.msra.mxu0 0.0
    %246 = vmatprep.subr.mxu0 0.0
    %247 = vmatpush1.msra.mxu0 0.0
    %248 = vmatprep.subr.mxu0 0.0
    %249 = vmatpush1.msra.mxu0 0.0
    %250 = vmatprep.subr.mxu0 0.0
    %251 = vmatpush1.msra.mxu0 0.0
    %252 = vmatprep.subr.mxu0 0.0
    %253 = vmatpush1.msra.mxu0 0.0
    %254 = vmatprep.subr.mxu0 0.0
    %255 = vmatpush1.msra.mxu0 0.0
    %256 = vmatprep.subr.mxu0 0.0
    %257 = vmatpush1.msra.mxu0 0.0
    %258 = vmatprep.subr.mxu0 %v155
    %259 = vmatpush1.msra.mxu0 %v153
    %260 = vmatprep.subr.mxu0 0.0
    %261 = vmatpush2.msra.mxu0 0.0
    %262 = vmatprep.subr.mxu0 0.0
    %263 = vmatpush2.msra.mxu0 0.0
    %264 = vmatprep.subr.mxu0 0.0
    %265 = vmatpush2.msra.mxu0 0.0
    %266 = vmatprep.subr.mxu0 0.0
    %267 = vmatpush2.msra.mxu0 0.0
    %268 = vmatprep.subr.mxu0 0.0
    %269 = vmatpush2.msra.mxu0 0.0
    %270 = vmatprep.subr.mxu0 0.0
    %271 = vmatpush2.msra.mxu0 0.0
    %272 = vmatprep.subr.mxu0 0.0
    %273 = vmatpush2.msra.mxu0 0.0
    %274 = vmatprep.subr.mxu0 0.0
    %275 = vmatpush2.msra.mxu0 0.0
    %276 = vmatprep.subr.mxu0 0.0
    %277 = vmatpush2.msra.mxu0 0.0
    %278 = vmatprep.subr.mxu0 0.0
    %279 = vmatpush2.msra.mxu0 0.0
    %280 = vmatprep.subr.mxu0 0.0
    %281 = vmatpush2.msra.mxu0 0.0
    %282 = vmatprep.subr.mxu0 0.0
    %283 = vmatpush2.msra.mxu0 0.0
    %284 = vmatprep.subr.mxu0 0.0
    %285 = vmatpush2.msra.mxu0 0.0
    %286 = vmatprep.subr.mxu0 0.0
    %287 = vmatpush2.msra.mxu0 0.0
    %288 = vmatprep.subr.mxu0 0.0
    %289 = vmatpush2.msra.mxu0 0.0
    %290 = vmatprep.subr.mxu0 0.0
    %291 = vmatpush2.msra.mxu0 0.0
    %292 = vmatprep.mubr.f32.mxu0 0.0
    %293 = vmatmul.mubr.f32.gmra.mxu0 %v146
    %v294 = vpop.f32.mrf.mxu0
    %v295 = vadd.f32 %v117, %v294
    %v296 = vpop.f32.mrf.mxu0
    %v297 = vadd.f32 %v121, %v296
    %298 = vdwg.mxu0
    %299 = vmatprep.subr.mxu0 %v100
    %300 = vmatpush1.msra.mxu0 %v99
    %301 = vmatprep.subr.mxu0 %v96
    %302 = vmatpush1.msra.mxu0 %v95
    %303 = vmatprep.subr.mxu0 %v92
    %304 = vmatpush1.msra.mxu0 %v91
    %305 = vmatprep.subr.mxu0 %v88
    %306 = vmatpush1.msra.mxu0 %v87
    %307 = vmatprep.subr.mxu0 %v84
    %308 = vmatpush1.msra.mxu0 %v83
    %309 = vmatprep.subr.mxu0 %v80
    %310 = vmatpush1.msra.mxu0 %v79
    %311 = vmatprep.subr.mxu0 %v76
    %312 = vmatpush1.msra.mxu0 %v75
    %313 = vmatprep.subr.mxu0 %v72
    %314 = vmatpush1.msra.mxu0 %v71
    %315 = vmatprep.subr.mxu0 %v68
    %316 = vmatpush1.msra.mxu0 %v67
    %317 = vmatprep.subr.mxu0 %v64
    %318 = vmatpush1.msra.mxu0 %v63
    %319 = vmatprep.subr.mxu0 %v60
    %320 = vmatpush1.msra.mxu0 %v59
    %321 = vmatprep.subr.mxu0 %v56
    %322 = vmatpush1.msra.mxu0 %v55
    %323 = vmatprep.subr.mxu0 %v52
    %324 = vmatpush1.msra.mxu0 %v51
    %325 = vmatprep.subr.mxu0 %v48
    %326 = vmatpush1.msra.mxu0 %v47
    %327 = vmatprep.subr.mxu0 %v44
    %328 = vmatpush1.msra.mxu0 %v43
    %329 = vmatprep.subr.mxu0 %v40
    %330 = vmatpush1.msra.mxu0 %v39
    %331 = vmatprep.subr.mxu0 0.0
    %332 = vmatpush2.msra.mxu0 0.0
    %333 = vmatprep.subr.mxu0 0.0
    %334 = vmatpush2.msra.mxu0 0.0
    %335 = vmatprep.subr.mxu0 0.0
    %336 = vmatpush2.msra.mxu0 0.0
    %337 = vmatprep.subr.mxu0 0.0
    %338 = vmatpush2.msra.mxu0 0.0
    %339 = vmatprep.subr.mxu0 0.0
    %340 = vmatpush2.msra.mxu0 0.0
    %341 = vmatprep.subr.mxu0 0.0
    %342 = vmatpush2.msra.mxu0 0.0
    %343 = vmatprep.subr.mxu0 0.0
    %344 = vmatpush2.msra.mxu0 0.0
    %345 = vmatprep.subr.mxu0 0.0
    %346 = vmatpush2.msra.mxu0 0.0
    %347 = vmatprep.subr.mxu0 0.0
    %348 = vmatpush2.msra.mxu0 0.0
    %349 = vmatprep.subr.mxu0 0.0
    %350 = vmatpush2.msra.mxu0 0.0
    %351 = vmatprep.subr.mxu0 0.0
    %352 = vmatpush2.msra.mxu0 0.0
    %353 = vmatprep.subr.mxu0 0.0
    %354 = vmatpush2.msra.mxu0 0.0
    %355 = vmatprep.subr.mxu0 0.0
    %356 = vmatpush2.msra.mxu0 0.0
    %357 = vmatprep.subr.mxu0 0.0
    %358 = vmatpush2.msra.mxu0 0.0
    %359 = vmatprep.subr.mxu0 0.0
    %360 = vmatpush2.msra.mxu0 0.0
    %361 = vmatprep.subr.mxu0 0.0
    %362 = vmatpush2.msra.mxu0 0.0
    %363 = vmatprep.mubr.f32.mxu0 0.0
    %364 = vmatmul.mubr.f32.gmra.mxu0 0.0
    %v365 = vpop.f32.mrf.mxu0
    %v366 = vadd.f32 0.0, %v365
    %v367 = vpop.f32.mrf.mxu0
    %v368 = vadd.f32 0.0, %v367
    %369 = vdwg.mxu0
    %370 = vmatprep.subr.mxu0 %v102
    %371 = vmatpush1.msra.mxu0 %v101
    %372 = vmatprep.subr.mxu0 %v98
    %373 = vmatpush1.msra.mxu0 %v97
    %374 = vmatprep.subr.mxu0 %v94
    %375 = vmatpush1.msra.mxu0 %v93
    %376 = vmatprep.subr.mxu0 %v90
    %377 = vmatpush1.msra.mxu0 %v89
    %378 = vmatprep.subr.mxu0 %v86
    %379 = vmatpush1.msra.mxu0 %v85
    %380 = vmatprep.subr.mxu0 %v82
    %381 = vmatpush1.msra.mxu0 %v81
    %382 = vmatprep.subr.mxu0 %v78
    %383 = vmatpush1.msra.mxu0 %v77
    %384 = vmatprep.subr.mxu0 %v74
    %385 = vmatpush1.msra.mxu0 %v73
    %386 = vmatprep.subr.mxu0 %v70
    %387 = vmatpush1.msra.mxu0 %v69
    %388 = vmatprep.subr.mxu0 %v66
    %389 = vmatpush1.msra.mxu0 %v65
    %390 = vmatprep.subr.mxu0 %v62
    %391 = vmatpush1.msra.mxu0 %v61
    %392 = vmatprep.subr.mxu0 %v58
    %393 = vmatpush1.msra.mxu0 %v57
    %394 = vmatprep.subr.mxu0 %v54
    %395 = vmatpush1.msra.mxu0 %v53
    %396 = vmatprep.subr.mxu0 %v50
    %397 = vmatpush1.msra.mxu0 %v49
    %398 = vmatprep.subr.mxu0 %v46
    %399 = vmatpush1.msra.mxu0 %v45
    %400 = vmatprep.subr.mxu0 %v42
    %401 = vmatpush1.msra.mxu0 %v41
    %402 = vmatprep.subr.mxu0 0.0
    %403 = vmatpush2.msra.mxu0 0.0
    %404 = vmatprep.subr.mxu0 0.0
    %405 = vmatpush2.msra.mxu0 0.0
    %406 = vmatprep.subr.mxu0 0.0
    %407 = vmatpush2.msra.mxu0 0.0
    %408 = vmatprep.subr.mxu0 0.0
    %409 = vmatpush2.msra.mxu0 0.0
    %410 = vmatprep.subr.mxu0 0.0
    %411 = vmatpush2.msra.mxu0 0.0
    %412 = vmatprep.subr.mxu0 0.0
    %413 = vmatpush2.msra.mxu0 0.0
    %414 = vmatprep.subr.mxu0 0.0
    %415 = vmatpush2.msra.mxu0 0.0
    %416 = vmatprep.subr.mxu0 0.0
    %417 = vmatpush2.msra.mxu0 0.0
    %418 = vmatprep.subr.mxu0 0.0
    %419 = vmatpush2.msra.mxu0 0.0
    %420 = vmatprep.subr.mxu0 0.0
    %421 = vmatpush2.msra.mxu0 0.0
    %422 = vmatprep.subr.mxu0 0.0
    %423 = vmatpush2.msra.mxu0 0.0
    %424 = vmatprep.subr.mxu0 0.0
    %425 = vmatpush2.msra.mxu0 0.0
    %426 = vmatprep.subr.mxu0 0.0
    %427 = vmatpush2.msra.mxu0 0.0
    %428 = vmatprep.subr.mxu0 0.0
    %429 = vmatpush2.msra.mxu0 0.0
    %430 = vmatprep.subr.mxu0 0.0
    %431 = vmatpush2.msra.mxu0 0.0
    %432 = vmatprep.subr.mxu0 0.0
    %433 = vmatpush2.msra.mxu0 0.0
    %434 = vmatprep.mubr.f32.mxu0 0.0
    %435 = vmatmul.mubr.f32.gmra.mxu0 0.0
    %v436 = vpop.f32.mrf.mxu0
    %v437 = vadd.f32 0.0, %v436
    %v438 = vpop.f32.mrf.mxu0
    %v439 = vadd.f32 0.0, %v438
    %440 = vdwg.mxu0
    %v441 = vadd.f32 %v224, %v366
    %v442 = vadd.f32 %v226, %v368
    %v443 = vadd.f32 %v295, %v437
    %v444 = vadd.f32 %v297, %v439
    %v445 = vxor.u32 %v441, 2147483648
    %v446 = vmul.f32 %v445, 1.442695
    %v447 = vpow.pop %v446
    %v448 = vadd.f32 %v447, 1.0
    %v449 = vrcp.pop %v448
    %v450 = vmul.f32 1.0, %v449
    %v451 = vxor.u32 %v442, 2147483648
    %v452 = vmul.f32 %v451, 1.442695
    %v453 = vpow.pop %v452
    %v454 = vadd.f32 %v453, 1.0
    %v455 = vrcp.pop %v454
    %v456 = vmul.f32 1.0, %v455
    %v457 = vtanh.pop %v443
    %v458 = vxor.u32 %v444, 2147483648
    %v459 = vmul.f32 %v458, 1.442695
    %v460 = vpow.pop %v459
    %v461 = vadd.f32 %v460, 1.0
    %v462 = vrcp.pop %v461
    %v463 = vmul.f32 1.0, %v462
    %v464 = vmul.f32 %v456, 0.0
    %v465 = vmul.f32 %v450, %v457
    %v466 = vadd.f32 %v464, %v465
    %v467 = vtanh.pop %v466
    %v468 = vmul.f32 %v463, %v467
    %s469 = scalar_lea.vmem %s0, 2
    %v470 = vld [vmem:[%s469] sm:$0x3]
    %v472 = vsel %vm144, %v470, 0
    %474 = vmatprep.subr.mxu0 0.0
    %475 = vmatpush1.msra.mxu0 0.0
    %476 = vmatprep.subr.mxu0 0.0
    %477 = vmatpush1.msra.mxu0 0.0
    %478 = vmatprep.subr.mxu0 0.0
    %479 = vmatpush1.msra.mxu0 0.0
    %480 = vmatprep.subr.mxu0 0.0
    %481 = vmatpush1.msra.mxu0 0.0
    %482 = vmatprep.subr.mxu0 0.0
    %483 = vmatpush1.msra.mxu0 0.0
    %484 = vmatprep.subr.mxu0 0.0
    %485 = vmatpush1.msra.mxu0 0.0
    %486 = vmatprep.subr.mxu0 0.0
    %487 = vmatpush1.msra.mxu0 0.0
    %488 = vmatprep.subr.mxu0 0.0
    %489 = vmatpush1.msra.mxu0 0.0
    %490 = vmatprep.subr.mxu0 0.0
    %491 = vmatpush1.msra.mxu0 0.0
    %492 = vmatprep.subr.mxu0 0.0
    %493 = vmatpush1.msra.mxu0 0.0
    %494 = vmatprep.subr.mxu0 0.0
    %495 = vmatpush1.msra.mxu0 0.0
    %496 = vmatprep.subr.mxu0 0.0
    %497 = vmatpush1.msra.mxu0 0.0
    %498 = vmatprep.subr.mxu0 0.0
    %499 = vmatpush1.msra.mxu0 0.0
    %500 = vmatprep.subr.mxu0 0.0
    %501 = vmatpush1.msra.mxu0 0.0
    %502 = vmatprep.subr.mxu0 0.0
    %503 = vmatpush1.msra.mxu0 0.0
    %504 = vmatprep.subr.mxu0 %v151
    %505 = vmatpush1.msra.mxu0 %v149
    %506 = vmatprep.subr.mxu0 0.0
    %507 = vmatpush2.msra.mxu0 0.0
    %508 = vmatprep.subr.mxu0 0.0
    %509 = vmatpush2.msra.mxu0 0.0
    %510 = vmatprep.subr.mxu0 0.0
    %511 = vmatpush2.msra.mxu0 0.0
    %512 = vmatprep.subr.mxu0 0.0
    %513 = vmatpush2.msra.mxu0 0.0
    %514 = vmatprep.subr.mxu0 0.0
    %515 = vmatpush2.msra.mxu0 0.0
    %516 = vmatprep.subr.mxu0 0.0
    %517 = vmatpush2.msra.mxu0 0.0
    %518 = vmatprep.subr.mxu0 0.0
    %519 = vmatpush2.msra.mxu0 0.0
    %520 = vmatprep.subr.mxu0 0.0
    %521 = vmatpush2.msra.mxu0 0.0
    %522 = vmatprep.subr.mxu0 0.0
    %523 = vmatpush2.msra.mxu0 0.0
    %524 = vmatprep.subr.mxu0 0.0
    %525 = vmatpush2.msra.mxu0 0.0
    %526 = vmatprep.subr.mxu0 0.0
    %527 = vmatpush2.msra.mxu0 0.0
    %528 = vmatprep.subr.mxu0 0.0
    %529 = vmatpush2.msra.mxu0 0.0
    %530 = vmatprep.subr.mxu0 0.0
    %531 = vmatpush2.msra.mxu0 0.0
    %532 = vmatprep.subr.mxu0 0.0
    %533 = vmatpush2.msra.mxu0 0.0
    %534 = vmatprep.subr.mxu0 0.0
    %535 = vmatpush2.msra.mxu0 0.0
    %536 = vmatprep.subr.mxu0 0.0
    %537 = vmatpush2.msra.mxu0 0.0
    %538 = vmatprep.mubr.f32.mxu0 0.0
    %539 = vmatmul.mubr.f32.gmra.mxu0 %v472
    %v540 = vpop.f32.mrf.mxu0
    %v541 = vadd.f32 %v109, %v540
    %v542 = vpop.f32.mrf.mxu0
    %v543 = vadd.f32 %v113, %v542
    %544 = vdwg.mxu0
    %545 = vmatprep.subr.mxu0 0.0
    %546 = vmatpush1.msra.mxu0 0.0
    %547 = vmatprep.subr.mxu0 0.0
    %548 = vmatpush1.msra.mxu0 0.0
    %549 = vmatprep.subr.mxu0 0.0
    %550 = vmatpush1.msra.mxu0 0.0
    %551 = vmatprep.subr.mxu0 0.0
    %552 = vmatpush1.msra.mxu0 0.0
    %553 = vmatprep.subr.mxu0 0.0
    %554 = vmatpush1.msra.mxu0 0.0
    %555 = vmatprep.subr.mxu0 0.0
    %556 = vmatpush1.msra.mxu0 0.0
    %557 = vmatprep.subr.mxu0 0.0
    %558 = vmatpush1.msra.mxu0 0.0
    %559 = vmatprep.subr.mxu0 0.0
    %560 = vmatpush1.msra.mxu0 0.0
    %561 = vmatprep.subr.mxu0 0.0
    %562 = vmatpush1.msra.mxu0 0.0
    %563 = vmatprep.subr.mxu0 0.0
    %564 = vmatpush1.msra.mxu0 0.0
    %565 = vmatprep.subr.mxu0 0.0
    %566 = vmatpush1.msra.mxu0 0.0
    %567 = vmatprep.subr.mxu0 0.0
    %568 = vmatpush1.msra.mxu0 0.0
    %569 = vmatprep.subr.mxu0 0.0
    %570 = vmatpush1.msra.mxu0 0.0
    %571 = vmatprep.subr.mxu0 0.0
    %572 = vmatpush1.msra.mxu0 0.0
    %573 = vmatprep.subr.mxu0 0.0
    %574 = vmatpush1.msra.mxu0 0.0
    %575 = vmatprep.subr.mxu0 %v155
    %576 = vmatpush1.msra.mxu0 %v153
    %577 = vmatprep.subr.mxu0 0.0
    %578 = vmatpush2.msra.mxu0 0.0
    %579 = vmatprep.subr.mxu0 0.0
    %580 = vmatpush2.msra.mxu0 0.0
    %581 = vmatprep.subr.mxu0 0.0
    %582 = vmatpush2.msra.mxu0 0.0
    %583 = vmatprep.subr.mxu0 0.0
    %584 = vmatpush2.msra.mxu0 0.0
    %585 = vmatprep.subr.mxu0 0.0
    %586 = vmatpush2.msra.mxu0 0.0
    %587 = vmatprep.subr.mxu0 0.0
    %588 = vmatpush2.msra.mxu0 0.0
    %589 = vmatprep.subr.mxu0 0.0
    %590 = vmatpush2.msra.mxu0 0.0
    %591 = vmatprep.subr.mxu0 0.0
    %592 = vmatpush2.msra.mxu0 0.0
    %593 = vmatprep.subr.mxu0 0.0
    %594 = vmatpush2.msra.mxu0 0.0
    %595 = vmatprep.subr.mxu0 0.0
    %596 = vmatpush2.msra.mxu0 0.0
    %597 = vmatprep.subr.mxu0 0.0
    %598 = vmatpush2.msra.mxu0 0.0
    %599 = vmatprep.subr.mxu0 0.0
    %600 = vmatpush2.msra.mxu0 0.0
    %601 = vmatprep.subr.mxu0 0.0
    %602 = vmatpush2.msra.mxu0 0.0
    %603 = vmatprep.subr.mxu0 0.0
    %604 = vmatpush2.msra.mxu0 0.0
    %605 = vmatprep.subr.mxu0 0.0
    %606 = vmatpush2.msra.mxu0 0.0
    %607 = vmatprep.subr.mxu0 0.0
    %608 = vmatpush2.msra.mxu0 0.0
    %609 = vmatprep.mubr.f32.mxu0 0.0
    %610 = vmatmul.mubr.f32.gmra.mxu0 %v472
    %v611 = vpop.f32.mrf.mxu0
    %v612 = vadd.f32 %v117, %v611
    %v613 = vpop.f32.mrf.mxu0
    %v614 = vadd.f32 %v121, %v613
    %615 = vdwg.mxu0
    %616 = vmatprep.subr.mxu0 %v100
    %617 = vmatpush1.msra.mxu0 %v99
    %618 = vmatprep.subr.mxu0 %v96
    %619 = vmatpush1.msra.mxu0 %v95
    %620 = vmatprep.subr.mxu0 %v92
    %621 = vmatpush1.msra.mxu0 %v91
    %622 = vmatprep.subr.mxu0 %v88
    %623 = vmatpush1.msra.mxu0 %v87
    %624 = vmatprep.subr.mxu0 %v84
    %625 = vmatpush1.msra.mxu0 %v83
    %626 = vmatprep.subr.mxu0 %v80
    %627 = vmatpush1.msra.mxu0 %v79
    %628 = vmatprep.subr.mxu0 %v76
    %629 = vmatpush1.msra.mxu0 %v75
    %630 = vmatprep.subr.mxu0 %v72
    %631 = vmatpush1.msra.mxu0 %v71
    %632 = vmatprep.subr.mxu0 %v68
    %633 = vmatpush1.msra.mxu0 %v67
    %634 = vmatprep.subr.mxu0 %v64
    %635 = vmatpush1.msra.mxu0 %v63
    %636 = vmatprep.subr.mxu0 %v60
    %637 = vmatpush1.msra.mxu0 %v59
    %638 = vmatprep.subr.mxu0 %v56
    %639 = vmatpush1.msra.mxu0 %v55
    %640 = vmatprep.subr.mxu0 %v52
    %641 = vmatpush1.msra.mxu0 %v51
    %642 = vmatprep.subr.mxu0 %v48
    %643 = vmatpush1.msra.mxu0 %v47
    %644 = vmatprep.subr.mxu0 %v44
    %645 = vmatpush1.msra.mxu0 %v43
    %646 = vmatprep.subr.mxu0 %v40
    %647 = vmatpush1.msra.mxu0 %v39
    %648 = vmatprep.subr.mxu0 0.0
    %649 = vmatpush2.msra.mxu0 0.0
    %650 = vmatprep.subr.mxu0 0.0
    %651 = vmatpush2.msra.mxu0 0.0
    %652 = vmatprep.subr.mxu0 0.0
    %653 = vmatpush2.msra.mxu0 0.0
    %654 = vmatprep.subr.mxu0 0.0
    %655 = vmatpush2.msra.mxu0 0.0
    %656 = vmatprep.subr.mxu0 0.0
    %657 = vmatpush2.msra.mxu0 0.0
    %658 = vmatprep.subr.mxu0 0.0
    %659 = vmatpush2.msra.mxu0 0.0
    %660 = vmatprep.subr.mxu0 0.0
    %661 = vmatpush2.msra.mxu0 0.0
    %662 = vmatprep.subr.mxu0 0.0
    %663 = vmatpush2.msra.mxu0 0.0
    %664 = vmatprep.subr.mxu0 0.0
    %665 = vmatpush2.msra.mxu0 0.0
    %666 = vmatprep.subr.mxu0 0.0
    %667 = vmatpush2.msra.mxu0 0.0
    %668 = vmatprep.subr.mxu0 0.0
    %669 = vmatpush2.msra.mxu0 0.0
    %670 = vmatprep.subr.mxu0 0.0
    %671 = vmatpush2.msra.mxu0 0.0
    %672 = vmatprep.subr.mxu0 0.0
    %673 = vmatpush2.msra.mxu0 0.0
    %674 = vmatprep.subr.mxu0 0.0
    %675 = vmatpush2.msra.mxu0 0.0
    %676 = vmatprep.subr.mxu0 0.0
    %677 = vmatpush2.msra.mxu0 0.0
    %678 = vmatprep.subr.mxu0 0.0
    %679 = vmatpush2.msra.mxu0 0.0
    %680 = vmatprep.mubr.f32.mxu0 0.0
    %681 = vmatmul.mubr.f32.gmra.mxu0 %v468
    %v682 = vpop.f32.mrf.mxu0
    %v683 = vadd.f32 0.0, %v682
    %v684 = vpop.f32.mrf.mxu0
    %v685 = vadd.f32 0.0, %v684
    %686 = vdwg.mxu0
    %687 = vmatprep.subr.mxu0 %v102
    %688 = vmatpush1.msra.mxu0 %v101
    %689 = vmatprep.subr.mxu0 %v98
    %690 = vmatpush1.msra.mxu0 %v97
    %691 = vmatprep.subr.mxu0 %v94
    %692 = vmatpush1.msra.mxu0 %v93
    %693 = vmatprep.subr.mxu0 %v90
    %694 = vmatpush1.msra.mxu0 %v89
    %695 = vmatprep.subr.mxu0 %v86
    %696 = vmatpush1.msra.mxu0 %v85
    %697 = vmatprep.subr.mxu0 %v82
    %698 = vmatpush1.msra.mxu0 %v81
    %699 = vmatprep.subr.mxu0 %v78
    %700 = vmatpush1.msra.mxu0 %v77
    %701 = vmatprep.subr.mxu0 %v74
    %702 = vmatpush1.msra.mxu0 %v73
    %703 = vmatprep.subr.mxu0 %v70
    %704 = vmatpush1.msra.mxu0 %v69
    %705 = vmatprep.subr.mxu0 %v66
    %706 = vmatpush1.msra.mxu0 %v65
    %707 = vmatprep.subr.mxu0 %v62
    %708 = vmatpush1.msra.mxu0 %v61
    %709 = vmatprep.subr.mxu0 %v58
    %710 = vmatpush1.msra.mxu0 %v57
    %711 = vmatprep.subr.mxu0 %v54
    %712 = vmatpush1.msra.mxu0 %v53
    %713 = vmatprep.subr.mxu0 %v50
    %714 = vmatpush1.msra.mxu0 %v49
    %715 = vmatprep.subr.mxu0 %v46
    %716 = vmatpush1.msra.mxu0 %v45
    %717 = vmatprep.subr.mxu0 %v42
    %718 = vmatpush1.msra.mxu0 %v41
    %719 = vmatprep.subr.mxu0 0.0
    %720 = vmatpush2.msra.mxu0 0.0
    %721 = vmatprep.subr.mxu0 0.0
    %722 = vmatpush2.msra.mxu0 0.0
    %723 = vmatprep.subr.mxu0 0.0
    %724 = vmatpush2.msra.mxu0 0.0
    %725 = vmatprep.subr.mxu0 0.0
    %726 = vmatpush2.msra.mxu0 0.0
    %727 = vmatprep.subr.mxu0 0.0
    %728 = vmatpush2.msra.mxu0 0.0
    %729 = vmatprep.subr.mxu0 0.0
    %730 = vmatpush2.msra.mxu0 0.0
    %731 = vmatprep.subr.mxu0 0.0
    %732 = vmatpush2.msra.mxu0 0.0
    %733 = vmatprep.subr.mxu0 0.0
    %734 = vmatpush2.msra.mxu0 0.0
    %735 = vmatprep.subr.mxu0 0.0
    %736 = vmatpush2.msra.mxu0 0.0
    %737 = vmatprep.subr.mxu0 0.0
    %738 = vmatpush2.msra.mxu0 0.0
    %739 = vmatprep.subr.mxu0 0.0
    %740 = vmatpush2.msra.mxu0 0.0
    %741 = vmatprep.subr.mxu0 0.0
    %742 = vmatpush2.msra.mxu0 0.0
    %743 = vmatprep.subr.mxu0 0.0
    %744 = vmatpush2.msra.mxu0 0.0
    %745 = vmatprep.subr.mxu0 0.0
    %746 = vmatpush2.msra.mxu0 0.0
    %747 = vmatprep.subr.mxu0 0.0
    %748 = vmatpush2.msra.mxu0 0.0
    %749 = vmatprep.subr.mxu0 0.0
    %750 = vmatpush2.msra.mxu0 0.0
    %751 = vmatprep.mubr.f32.mxu0 0.0
    %752 = vmatmul.mubr.f32.gmra.mxu0 %v468
    %v753 = vpop.f32.mrf.mxu0
    %v754 = vadd.f32 0.0, %v753
    %v755 = vpop.f32.mrf.mxu0
    %v756 = vadd.f32 0.0, %v755
    %757 = vdwg.mxu0
    %v758 = vadd.f32 %v541, %v683
    %v759 = vadd.f32 %v543, %v685
    %v760 = vadd.f32 %v612, %v754
    %v761 = vadd.f32 %v614, %v756
    %v762 = vxor.u32 %v758, 2147483648
    %v763 = vmul.f32 %v762, 1.442695
    %v764 = vpow.pop %v763
    %v765 = vadd.f32 %v764, 1.0
    %v766 = vrcp.pop %v765
    %v767 = vmul.f32 1.0, %v766
    %v768 = vxor.u32 %v759, 2147483648
    %v769 = vmul.f32 %v768, 1.442695
    %v770 = vpow.pop %v769
    %v771 = vadd.f32 %v770, 1.0
    %v772 = vrcp.pop %v771
    %v773 = vmul.f32 1.0, %v772
    %v774 = vtanh.pop %v760
    %v775 = vxor.u32 %v761, 2147483648
    %v776 = vmul.f32 %v775, 1.442695
    %v777 = vpow.pop %v776
    %v778 = vadd.f32 %v777, 1.0
    %v779 = vrcp.pop %v778
    %v780 = vmul.f32 1.0, %v779
    %v781 = vmul.f32 %v773, %v466
    %v782 = vmul.f32 %v767, %v774
    %v783 = vadd.f32 %v781, %v782
    %v784 = vtanh.pop %v783
    %v785 = vmul.f32 %v780, %v784
    %s786 = scalar_lea.vmem %s0, 4
    %v787 = vld [vmem:[%s786] sm:$0x3]
    %v789 = vsel %vm144, %v787, 0
    %791 = vmatprep.subr.mxu0 0.0
    %792 = vmatpush1.msra.mxu0 0.0
    %793 = vmatprep.subr.mxu0 0.0
    %794 = vmatpush1.msra.mxu0 0.0
    %795 = vmatprep.subr.mxu0 0.0
    %796 = vmatpush1.msra.mxu0 0.0
    %797 = vmatprep.subr.mxu0 0.0
    %798 = vmatpush1.msra.mxu0 0.0
    %799 = vmatprep.subr.mxu0 0.0
    %800 = vmatpush1.msra.mxu0 0.0
    %801 = vmatprep.subr.mxu0 0.0
    %802 = vmatpush1.msra.mxu0 0.0
    %803 = vmatprep.subr.mxu0 0.0
    %804 = vmatpush1.msra.mxu0 0.0
    %805 = vmatprep.subr.mxu0 0.0
    %806 = vmatpush1.msra.mxu0 0.0
    %807 = vmatprep.subr.mxu0 0.0
    %808 = vmatpush1.msra.mxu0 0.0
    %809 = vmatprep.subr.mxu0 0.0
    %810 = vmatpush1.msra.mxu0 0.0
    %811 = vmatprep.subr.mxu0 0.0
    %812 = vmatpush1.msra.mxu0 0.0
    %813 = vmatprep.subr.mxu0 0.0
    %814 = vmatpush1.msra.mxu0 0.0
    %815 = vmatprep.subr.mxu0 0.0
    %816 = vmatpush1.msra.mxu0 0.0
    %817 = vmatprep.subr.mxu0 0.0
    %818 = vmatpush1.msra.mxu0 0.0
    %819 = vmatprep.subr.mxu0 0.0
    %820 = vmatpush1.msra.mxu0 0.0
    %821 = vmatprep.subr.mxu0 %v151
    %822 = vmatpush1.msra.mxu0 %v149
    %823 = vmatprep.subr.mxu0 0.0
    %824 = vmatpush2.msra.mxu0 0.0
    %825 = vmatprep.subr.mxu0 0.0
    %826 = vmatpush2.msra.mxu0 0.0
    %827 = vmatprep.subr.mxu0 0.0
    %828 = vmatpush2.msra.mxu0 0.0
    %829 = vmatprep.subr.mxu0 0.0
    %830 = vmatpush2.msra.mxu0 0.0
    %831 = vmatprep.subr.mxu0 0.0
    %832 = vmatpush2.msra.mxu0 0.0
    %833 = vmatprep.subr.mxu0 0.0
    %834 = vmatpush2.msra.mxu0 0.0
    %835 = vmatprep.subr.mxu0 0.0
    %836 = vmatpush2.msra.mxu0 0.0
    %837 = vmatprep.subr.mxu0 0.0
    %838 = vmatpush2.msra.mxu0 0.0
    %839 = vmatprep.subr.mxu0 0.0
    %840 = vmatpush2.msra.mxu0 0.0
    %841 = vmatprep.subr.mxu0 0.0
    %842 = vmatpush2.msra.mxu0 0.0
    %843 = vmatprep.subr.mxu0 0.0
    %844 = vmatpush2.msra.mxu0 0.0
    %845 = vmatprep.subr.mxu0 0.0
    %846 = vmatpush2.msra.mxu0 0.0
    %847 = vmatprep.subr.mxu0 0.0
    %848 = vmatpush2.msra.mxu0 0.0
    %849 = vmatprep.subr.mxu0 0.0
    %850 = vmatpush2.msra.mxu0 0.0
    %851 = vmatprep.subr.mxu0 0.0
    %852 = vmatpush2.msra.mxu0 0.0
    %853 = vmatprep.subr.mxu0 0.0
    %854 = vmatpush2.msra.mxu0 0.0
    %855 = vmatprep.mubr.f32.mxu0 0.0
    %856 = vmatmul.mubr.f32.gmra.mxu0 %v789
    %v857 = vpop.f32.mrf.mxu0
    %v858 = vadd.f32 %v109, %v857
    %v859 = vpop.f32.mrf.mxu0
    %v860 = vadd.f32 %v113, %v859
    %861 = vdwg.mxu0
    %862 = vmatprep.subr.mxu0 0.0
    %863 = vmatpush1.msra.mxu0 0.0
    %864 = vmatprep.subr.mxu0 0.0
    %865 = vmatpush1.msra.mxu0 0.0
    %866 = vmatprep.subr.mxu0 0.0
    %867 = vmatpush1.msra.mxu0 0.0
    %868 = vmatprep.subr.mxu0 0.0
    %869 = vmatpush1.msra.mxu0 0.0
    %870 = vmatprep.subr.mxu0 0.0
    %871 = vmatpush1.msra.mxu0 0.0
    %872 = vmatprep.subr.mxu0 0.0
    %873 = vmatpush1.msra.mxu0 0.0
    %874 = vmatprep.subr.mxu0 0.0
    %875 = vmatpush1.msra.mxu0 0.0
    %876 = vmatprep.subr.mxu0 0.0
    %877 = vmatpush1.msra.mxu0 0.0
    %878 = vmatprep.subr.mxu0 0.0
    %879 = vmatpush1.msra.mxu0 0.0
    %880 = vmatprep.subr.mxu0 0.0
    %881 = vmatpush1.msra.mxu0 0.0
    %882 = vmatprep.subr.mxu0 0.0
    %883 = vmatpush1.msra.mxu0 0.0
    %884 = vmatprep.subr.mxu0 0.0
    %885 = vmatpush1.msra.mxu0 0.0
    %886 = vmatprep.subr.mxu0 0.0
    %887 = vmatpush1.msra.mxu0 0.0
    %888 = vmatprep.subr.mxu0 0.0
    %889 = vmatpush1.msra.mxu0 0.0
    %890 = vmatprep.subr.mxu0 0.0
    %891 = vmatpush1.msra.mxu0 0.0
    %892 = vmatprep.subr.mxu0 %v155
    %893 = vmatpush1.msra.mxu0 %v153
    %894 = vmatprep.subr.mxu0 0.0
    %895 = vmatpush2.msra.mxu0 0.0
    %896 = vmatprep.subr.mxu0 0.0
    %897 = vmatpush2.msra.mxu0 0.0
    %898 = vmatprep.subr.mxu0 0.0
    %899 = vmatpush2.msra.mxu0 0.0
    %900 = vmatprep.subr.mxu0 0.0
    %901 = vmatpush2.msra.mxu0 0.0
    %902 = vmatprep.subr.mxu0 0.0
    %903 = vmatpush2.msra.mxu0 0.0
    %904 = vmatprep.subr.mxu0 0.0
    %905 = vmatpush2.msra.mxu0 0.0
    %906 = vmatprep.subr.mxu0 0.0
    %907 = vmatpush2.msra.mxu0 0.0
    %908 = vmatprep.subr.mxu0 0.0
    %909 = vmatpush2.msra.mxu0 0.0
    %910 = vmatprep.subr.mxu0 0.0
    %911 = vmatpush2.msra.mxu0 0.0
    %912 = vmatprep.subr.mxu0 0.0
    %913 = vmatpush2.msra.mxu0 0.0
    %914 = vmatprep.subr.mxu0 0.0
    %915 = vmatpush2.msra.mxu0 0.0
    %916 = vmatprep.subr.mxu0 0.0
    %917 = vmatpush2.msra.mxu0 0.0
    %918 = vmatprep.subr.mxu0 0.0
    %919 = vmatpush2.msra.mxu0 0.0
    %920 = vmatprep.subr.mxu0 0.0
    %921 = vmatpush2.msra.mxu0 0.0
    %922 = vmatprep.subr.mxu0 0.0
    %923 = vmatpush2.msra.mxu0 0.0
    %924 = vmatprep.subr.mxu0 0.0
    %925 = vmatpush2.msra.mxu0 0.0
    %926 = vmatprep.mubr.f32.mxu0 0.0
    %927 = vmatmul.mubr.f32.gmra.mxu0 %v789
    %v928 = vpop.f32.mrf.mxu0
    %v929 = vadd.f32 %v117, %v928
    %v930 = vpop.f32.mrf.mxu0
    %v931 = vadd.f32 %v121, %v930
    %932 = vdwg.mxu0
    %933 = vmatprep.subr.mxu0 %v100
    %934 = vmatpush1.msra.mxu0 %v99
    %935 = vmatprep.subr.mxu0 %v96
    %936 = vmatpush1.msra.mxu0 %v95
    %937 = vmatprep.subr.mxu0 %v92
    %938 = vmatpush1.msra.mxu0 %v91
    %939 = vmatprep.subr.mxu0 %v88
    %940 = vmatpush1.msra.mxu0 %v87
    %941 = vmatprep.subr.mxu0 %v84
    %942 = vmatpush1.msra.mxu0 %v83
    %943 = vmatprep.subr.mxu0 %v80
    %944 = vmatpush1.msra.mxu0 %v79
    %945 = vmatprep.subr.mxu0 %v76
    %946 = vmatpush1.msra.mxu0 %v75
    %947 = vmatprep.subr.mxu0 %v72
    %948 = vmatpush1.msra.mxu0 %v71
    %949 = vmatprep.subr.mxu0 %v68
    %950 = vmatpush1.msra.mxu0 %v67
    %951 = vmatprep.subr.mxu0 %v64
    %952 = vmatpush1.msra.mxu0 %v63
    %953 = vmatprep.subr.mxu0 %v60
    %954 = vmatpush1.msra.mxu0 %v59
    %955 = vmatprep.subr.mxu0 %v56
    %956 = vmatpush1.msra.mxu0 %v55
    %957 = vmatprep.subr.mxu0 %v52
    %958 = vmatpush1.msra.mxu0 %v51
    %959 = vmatprep.subr.mxu0 %v48
    %960 = vmatpush1.msra.mxu0 %v47
    %961 = vmatprep.subr.mxu0 %v44
    %962 = vmatpush1.msra.mxu0 %v43
    %963 = vmatprep.subr.mxu0 %v40
    %964 = vmatpush1.msra.mxu0 %v39
    %965 = vmatprep.subr.mxu0 0.0
    %966 = vmatpush2.msra.mxu0 0.0
    %967 = vmatprep.subr.mxu0 0.0
    %968 = vmatpush2.msra.mxu0 0.0
    %969 = vmatprep.subr.mxu0 0.0
    %970 = vmatpush2.msra.mxu0 0.0
    %971 = vmatprep.subr.mxu0 0.0
    %972 = vmatpush2.msra.mxu0 0.0
    %973 = vmatprep.subr.mxu0 0.0
    %974 = vmatpush2.msra.mxu0 0.0
    %975 = vmatprep.subr.mxu0 0.0
    %976 = vmatpush2.msra.mxu0 0.0
    %977 = vmatprep.subr.mxu0 0.0
    %978 = vmatpush2.msra.mxu0 0.0
    %979 = vmatprep.subr.mxu0 0.0
    %980 = vmatpush2.msra.mxu0 0.0
    %981 = vmatprep.subr.mxu0 0.0
    %982 = vmatpush2.msra.mxu0 0.0
    %983 = vmatprep.subr.mxu0 0.0
    %984 = vmatpush2.msra.mxu0 0.0
    %985 = vmatprep.subr.mxu0 0.0
    %986 = vmatpush2.msra.mxu0 0.0
    %987 = vmatprep.subr.mxu0 0.0
    %988 = vmatpush2.msra.mxu0 0.0
    %989 = vmatprep.subr.mxu0 0.0
    %990 = vmatpush2.msra.mxu0 0.0
    %991 = vmatprep.subr.mxu0 0.0
    %992 = vmatpush2.msra.mxu0 0.0
    %993 = vmatprep.subr.mxu0 0.0
    %994 = vmatpush2.msra.mxu0 0.0
    %995 = vmatprep.subr.mxu0 0.0
    %996 = vmatpush2.msra.mxu0 0.0
    %997 = vmatprep.mubr.f32.mxu0 0.0
    %998 = vmatmul.mubr.f32.gmra.mxu0 %v785
    %v999 = vpop.f32.mrf.mxu0
    %v1000 = vadd.f32 0.0, %v999
    %v1001 = vpop.f32.mrf.mxu0
    %v1002 = vadd.f32 0.0, %v1001
    %1003 = vdwg.mxu0
    %1004 = vmatprep.subr.mxu0 %v102
    %1005 = vmatpush1.msra.mxu0 %v101
    %1006 = vmatprep.subr.mxu0 %v98
    %1007 = vmatpush1.msra.mxu0 %v97
    %1008 = vmatprep.subr.mxu0 %v94
    %1009 = vmatpush1.msra.mxu0 %v93
    %1010 = vmatprep.subr.mxu0 %v90
    %1011 = vmatpush1.msra.mxu0 %v89
    %1012 = vmatprep.subr.mxu0 %v86
    %1013 = vmatpush1.msra.mxu0 %v85
    %1014 = vmatprep.subr.mxu0 %v82
    %1015 = vmatpush1.msra.mxu0 %v81
    %1016 = vmatprep.subr.mxu0 %v78
    %1017 = vmatpush1.msra.mxu0 %v77
    %1018 = vmatprep.subr.mxu0 %v74
    %1019 = vmatpush1.msra.mxu0 %v73
    %1020 = vmatprep.subr.mxu0 %v70
    %1021 = vmatpush1.msra.mxu0 %v69
    %1022 = vmatprep.subr.mxu0 %v66
    %1023 = vmatpush1.msra.mxu0 %v65
    %1024 = vmatprep.subr.mxu0 %v62
    %1025 = vmatpush1.msra.mxu0 %v61
    %1026 = vmatprep.subr.mxu0 %v58
    %1027 = vmatpush1.msra.mxu0 %v57
    %1028 = vmatprep.subr.mxu0 %v54
    %1029 = vmatpush1.msra.mxu0 %v53
    %1030 = vmatprep.subr.mxu0 %v50
    %1031 = vmatpush1.msra.mxu0 %v49
    %1032 = vmatprep.subr.mxu0 %v46
    %1033 = vmatpush1.msra.mxu0 %v45
    %1034 = vmatprep.subr.mxu0 %v42
    %1035 = vmatpush1.msra.mxu0 %v41
    %1036 = vmatprep.subr.mxu0 0.0
    %1037 = vmatpush2.msra.mxu0 0.0
    %1038 = vmatprep.subr.mxu0 0.0
    %1039 = vmatpush2.msra.mxu0 0.0
    %1040 = vmatprep.subr.mxu0 0.0
    %1041 = vmatpush2.msra.mxu0 0.0
    %1042 = vmatprep.subr.mxu0 0.0
    %1043 = vmatpush2.msra.mxu0 0.0
    %1044 = vmatprep.subr.mxu0 0.0
    %1045 = vmatpush2.msra.mxu0 0.0
    %1046 = vmatprep.subr.mxu0 0.0
    %1047 = vmatpush2.msra.mxu0 0.0
    %1048 = vmatprep.subr.mxu0 0.0
    %1049 = vmatpush2.msra.mxu0 0.0
    %1050 = vmatprep.subr.mxu0 0.0
    %1051 = vmatpush2.msra.mxu0 0.0
    %1052 = vmatprep.subr.mxu0 0.0
    %1053 = vmatpush2.msra.mxu0 0.0
    %1054 = vmatprep.subr.mxu0 0.0
    %1055 = vmatpush2.msra.mxu0 0.0
    %1056 = vmatprep.subr.mxu0 0.0
    %1057 = vmatpush2.msra.mxu0 0.0
    %1058 = vmatprep.subr.mxu0 0.0
    %1059 = vmatpush2.msra.mxu0 0.0
    %1060 = vmatprep.subr.mxu0 0.0
    %1061 = vmatpush2.msra.mxu0 0.0
    %1062 = vmatprep.subr.mxu0 0.0
    %1063 = vmatpush2.msra.mxu0 0.0
    %1064 = vmatprep.subr.mxu0 0.0
    %1065 = vmatpush2.msra.mxu0 0.0
    %1066 = vmatprep.subr.mxu0 0.0
    %1067 = vmatpush2.msra.mxu0 0.0
    %1068 = vmatprep.mubr.f32.mxu0 0.0
    %1069 = vmatmul.mubr.f32.gmra.mxu0 %v785
    %v1070 = vpop.f32.mrf.mxu0
    %v1071 = vadd.f32 0.0, %v1070
    %v1072 = vpop.f32.mrf.mxu0
    %v1073 = vadd.f32 0.0, %v1072
    %1074 = vdwg.mxu0
    %v1075 = vadd.f32 %v858, %v1000
    %v1076 = vadd.f32 %v860, %v1002
    %v1077 = vadd.f32 %v929, %v1071
    %v1078 = vadd.f32 %v931, %v1073
    %v1079 = vxor.u32 %v1075, 2147483648
    %v1080 = vmul.f32 %v1079, 1.442695
    %v1081 = vpow.pop %v1080
    %v1082 = vadd.f32 %v1081, 1.0
    %v1083 = vrcp.pop %v1082
    %v1084 = vmul.f32 1.0, %v1083
    %v1085 = vxor.u32 %v1076, 2147483648
    %v1086 = vmul.f32 %v1085, 1.442695
    %v1087 = vpow.pop %v1086
    %v1088 = vadd.f32 %v1087, 1.0
    %v1089 = vrcp.pop %v1088
    %v1090 = vmul.f32 1.0, %v1089
    %v1091 = vtanh.pop %v1077
    %v1092 = vxor.u32 %v1078, 2147483648
    %v1093 = vmul.f32 %v1092, 1.442695
    %v1094 = vpow.pop %v1093
    %v1095 = vadd.f32 %v1094, 1.0
    %v1096 = vrcp.pop %v1095
    %v1097 = vmul.f32 1.0, %v1096
    %v1098 = vmul.f32 %v1090, %v783
    %v1099 = vmul.f32 %v1084, %v1091
    %v1100 = vadd.f32 %v1098, %v1099
    %v1101 = vtanh.pop %v1100
    %v1102 = vmul.f32 %v1097, %v1101
    %s1103 = scalar_lea.vmem %s0, 6
    %v1104 = vld [vmem:[%s1103] sm:$0x3]
    %v1106 = vsel %vm144, %v1104, 0
    %1108 = vmatprep.subr.mxu0 0.0
    %1109 = vmatpush1.msra.mxu0 0.0
    %1110 = vmatprep.subr.mxu0 0.0
    %1111 = vmatpush1.msra.mxu0 0.0
    %1112 = vmatprep.subr.mxu0 0.0
    %1113 = vmatpush1.msra.mxu0 0.0
    %1114 = vmatprep.subr.mxu0 0.0
    %1115 = vmatpush1.msra.mxu0 0.0
    %1116 = vmatprep.subr.mxu0 0.0
    %1117 = vmatpush1.msra.mxu0 0.0
    %1118 = vmatprep.subr.mxu0 0.0
    %1119 = vmatpush1.msra.mxu0 0.0
    %1120 = vmatprep.subr.mxu0 0.0
    %1121 = vmatpush1.msra.mxu0 0.0
    %1122 = vmatprep.subr.mxu0 0.0
    %1123 = vmatpush1.msra.mxu0 0.0
    %1124 = vmatprep.subr.mxu0 0.0
    %1125 = vmatpush1.msra.mxu0 0.0
    %1126 = vmatprep.subr.mxu0 0.0
    %1127 = vmatpush1.msra.mxu0 0.0
    %1128 = vmatprep.subr.mxu0 0.0
    %1129 = vmatpush1.msra.mxu0 0.0
    %1130 = vmatprep.subr.mxu0 0.0
    %1131 = vmatpush1.msra.mxu0 0.0
    %1132 = vmatprep.subr.mxu0 0.0
    %1133 = vmatpush1.msra.mxu0 0.0
    %1134 = vmatprep.subr.mxu0 0.0
    %1135 = vmatpush1.msra.mxu0 0.0
    %1136 = vmatprep.subr.mxu0 0.0
    %1137 = vmatpush1.msra.mxu0 0.0
    %1138 = vmatprep.subr.mxu0 %v151
    %1139 = vmatpush1.msra.mxu0 %v149
    %1140 = vmatprep.subr.mxu0 0.0
    %1141 = vmatpush2.msra.mxu0 0.0
    %1142 = vmatprep.subr.mxu0 0.0
    %1143 = vmatpush2.msra.mxu0 0.0
    %1144 = vmatprep.subr.mxu0 0.0
    %1145 = vmatpush2.msra.mxu0 0.0
    %1146 = vmatprep.subr.mxu0 0.0
    %1147 = vmatpush2.msra.mxu0 0.0
    %1148 = vmatprep.subr.mxu0 0.0
    %1149 = vmatpush2.msra.mxu0 0.0
    %1150 = vmatprep.subr.mxu0 0.0
    %1151 = vmatpush2.msra.mxu0 0.0
    %1152 = vmatprep.subr.mxu0 0.0
    %1153 = vmatpush2.msra.mxu0 0.0
    %1154 = vmatprep.subr.mxu0 0.0
    %1155 = vmatpush2.msra.mxu0 0.0
    %1156 = vmatprep.subr.mxu0 0.0
    %1157 = vmatpush2.msra.mxu0 0.0
    %1158 = vmatprep.subr.mxu0 0.0
    %1159 = vmatpush2.msra.mxu0 0.0
    %1160 = vmatprep.subr.mxu0 0.0
    %1161 = vmatpush2.msra.mxu0 0.0
    %1162 = vmatprep.subr.mxu0 0.0
    %1163 = vmatpush2.msra.mxu0 0.0
    %1164 = vmatprep.subr.mxu0 0.0
    %1165 = vmatpush2.msra.mxu0 0.0
    %1166 = vmatprep.subr.mxu0 0.0
    %1167 = vmatpush2.msra.mxu0 0.0
    %1168 = vmatprep.subr.mxu0 0.0
    %1169 = vmatpush2.msra.mxu0 0.0
    %1170 = vmatprep.subr.mxu0 0.0
    %1171 = vmatpush2.msra.mxu0 0.0
    %1172 = vmatprep.mubr.f32.mxu0 0.0
    %1173 = vmatmul.mubr.f32.gmra.mxu0 %v1106
    %v1174 = vpop.f32.mrf.mxu0
    %v1175 = vadd.f32 %v109, %v1174
    %v1176 = vpop.f32.mrf.mxu0
    %v1177 = vadd.f32 %v113, %v1176
    %1178 = vdwg.mxu0
    %1179 = vmatprep.subr.mxu0 0.0
    %1180 = vmatpush1.msra.mxu0 0.0
    %1181 = vmatprep.subr.mxu0 0.0
    %1182 = vmatpush1.msra.mxu0 0.0
    %1183 = vmatprep.subr.mxu0 0.0
    %1184 = vmatpush1.msra.mxu0 0.0
    %1185 = vmatprep.subr.mxu0 0.0
    %1186 = vmatpush1.msra.mxu0 0.0
    %1187 = vmatprep.subr.mxu0 0.0
    %1188 = vmatpush1.msra.mxu0 0.0
    %1189 = vmatprep.subr.mxu0 0.0
    %1190 = vmatpush1.msra.mxu0 0.0
    %1191 = vmatprep.subr.mxu0 0.0
    %1192 = vmatpush1.msra.mxu0 0.0
    %1193 = vmatprep.subr.mxu0 0.0
    %1194 = vmatpush1.msra.mxu0 0.0
    %1195 = vmatprep.subr.mxu0 0.0
    %1196 = vmatpush1.msra.mxu0 0.0
    %1197 = vmatprep.subr.mxu0 0.0
    %1198 = vmatpush1.msra.mxu0 0.0
    %1199 = vmatprep.subr.mxu0 0.0
    %1200 = vmatpush1.msra.mxu0 0.0
    %1201 = vmatprep.subr.mxu0 0.0
    %1202 = vmatpush1.msra.mxu0 0.0
    %1203 = vmatprep.subr.mxu0 0.0
    %1204 = vmatpush1.msra.mxu0 0.0
    %1205 = vmatprep.subr.mxu0 0.0
    %1206 = vmatpush1.msra.mxu0 0.0
    %1207 = vmatprep.subr.mxu0 0.0
    %1208 = vmatpush1.msra.mxu0 0.0
    %1209 = vmatprep.subr.mxu0 %v155
    %1210 = vmatpush1.msra.mxu0 %v153
    %1211 = vmatprep.subr.mxu0 0.0
    %1212 = vmatpush2.msra.mxu0 0.0
    %1213 = vmatprep.subr.mxu0 0.0
    %1214 = vmatpush2.msra.mxu0 0.0
    %1215 = vmatprep.subr.mxu0 0.0
    %1216 = vmatpush2.msra.mxu0 0.0
    %1217 = vmatprep.subr.mxu0 0.0
    %1218 = vmatpush2.msra.mxu0 0.0
    %1219 = vmatprep.subr.mxu0 0.0
    %1220 = vmatpush2.msra.mxu0 0.0
    %1221 = vmatprep.subr.mxu0 0.0
    %1222 = vmatpush2.msra.mxu0 0.0
    %1223 = vmatprep.subr.mxu0 0.0
    %1224 = vmatpush2.msra.mxu0 0.0
    %1225 = vmatprep.subr.mxu0 0.0
    %1226 = vmatpush2.msra.mxu0 0.0
    %1227 = vmatprep.subr.mxu0 0.0
    %1228 = vmatpush2.msra.mxu0 0.0
    %1229 = vmatprep.subr.mxu0 0.0
    %1230 = vmatpush2.msra.mxu0 0.0
    %1231 = vmatprep.subr.mxu0 0.0
    %1232 = vmatpush2.msra.mxu0 0.0
    %1233 = vmatprep.subr.mxu0 0.0
    %1234 = vmatpush2.msra.mxu0 0.0
    %1235 = vmatprep.subr.mxu0 0.0
    %1236 = vmatpush2.msra.mxu0 0.0
    %1237 = vmatprep.subr.mxu0 0.0
    %1238 = vmatpush2.msra.mxu0 0.0
    %1239 = vmatprep.subr.mxu0 0.0
    %1240 = vmatpush2.msra.mxu0 0.0
    %1241 = vmatprep.subr.mxu0 0.0
    %1242 = vmatpush2.msra.mxu0 0.0
    %1243 = vmatprep.mubr.f32.mxu0 0.0
    %1244 = vmatmul.mubr.f32.gmra.mxu0 %v1106
    %v1245 = vpop.f32.mrf.mxu0
    %v1246 = vadd.f32 %v117, %v1245
    %v1247 = vpop.f32.mrf.mxu0
    %v1248 = vadd.f32 %v121, %v1247
    %1249 = vdwg.mxu0
    %1250 = vmatprep.subr.mxu0 %v100
    %1251 = vmatpush1.msra.mxu0 %v99
    %1252 = vmatprep.subr.mxu0 %v96
    %1253 = vmatpush1.msra.mxu0 %v95
    %1254 = vmatprep.subr.mxu0 %v92
    %1255 = vmatpush1.msra.mxu0 %v91
    %1256 = vmatprep.subr.mxu0 %v88
    %1257 = vmatpush1.msra.mxu0 %v87
    %1258 = vmatprep.subr.mxu0 %v84
    %1259 = vmatpush1.msra.mxu0 %v83
    %1260 = vmatprep.subr.mxu0 %v80
    %1261 = vmatpush1.msra.mxu0 %v79
    %1262 = vmatprep.subr.mxu0 %v76
    %1263 = vmatpush1.msra.mxu0 %v75
    %1264 = vmatprep.subr.mxu0 %v72
    %1265 = vmatpush1.msra.mxu0 %v71
    %1266 = vmatprep.subr.mxu0 %v68
    %1267 = vmatpush1.msra.mxu0 %v67
    %1268 = vmatprep.subr.mxu0 %v64
    %1269 = vmatpush1.msra.mxu0 %v63
    %1270 = vmatprep.subr.mxu0 %v60
    %1271 = vmatpush1.msra.mxu0 %v59
    %1272 = vmatprep.subr.mxu0 %v56
    %1273 = vmatpush1.msra.mxu0 %v55
    %1274 = vmatprep.subr.mxu0 %v52
    %1275 = vmatpush1.msra.mxu0 %v51
    %1276 = vmatprep.subr.mxu0 %v48
    %1277 = vmatpush1.msra.mxu0 %v47
    %1278 = vmatprep.subr.mxu0 %v44
    %1279 = vmatpush1.msra.mxu0 %v43
    %1280 = vmatprep.subr.mxu0 %v40
    %1281 = vmatpush1.msra.mxu0 %v39
    %1282 = vmatprep.subr.mxu0 0.0
    %1283 = vmatpush2.msra.mxu0 0.0
    %1284 = vmatprep.subr.mxu0 0.0
    %1285 = vmatpush2.msra.mxu0 0.0
    %1286 = vmatprep.subr.mxu0 0.0
    %1287 = vmatpush2.msra.mxu0 0.0
    %1288 = vmatprep.subr.mxu0 0.0
    %1289 = vmatpush2.msra.mxu0 0.0
    %1290 = vmatprep.subr.mxu0 0.0
    %1291 = vmatpush2.msra.mxu0 0.0
    %1292 = vmatprep.subr.mxu0 0.0
    %1293 = vmatpush2.msra.mxu0 0.0
    %1294 = vmatprep.subr.mxu0 0.0
    %1295 = vmatpush2.msra.mxu0 0.0
    %1296 = vmatprep.subr.mxu0 0.0
    %1297 = vmatpush2.msra.mxu0 0.0
    %1298 = vmatprep.subr.mxu0 0.0
    %1299 = vmatpush2.msra.mxu0 0.0
    %1300 = vmatprep.subr.mxu0 0.0
    %1301 = vmatpush2.msra.mxu0 0.0
    %1302 = vmatprep.subr.mxu0 0.0
    %1303 = vmatpush2.msra.mxu0 0.0
    %1304 = vmatprep.subr.mxu0 0.0
    %1305 = vmatpush2.msra.mxu0 0.0
    %1306 = vmatprep.subr.mxu0 0.0
    %1307 = vmatpush2.msra.mxu0 0.0
    %1308 = vmatprep.subr.mxu0 0.0
    %1309 = vmatpush2.msra.mxu0 0.0
    %1310 = vmatprep.subr.mxu0 0.0
    %1311 = vmatpush2.msra.mxu0 0.0
    %1312 = vmatprep.subr.mxu0 0.0
    %1313 = vmatpush2.msra.mxu0 0.0
    %1314 = vmatprep.mubr.f32.mxu0 0.0
    %1315 = vmatmul.mubr.f32.gmra.mxu0 %v1102
    %v1316 = vpop.f32.mrf.mxu0
    %v1317 = vadd.f32 0.0, %v1316
    %v1318 = vpop.f32.mrf.mxu0
    %v1319 = vadd.f32 0.0, %v1318
    %1320 = vdwg.mxu0
    %1321 = vmatprep.subr.mxu0 %v102
    %1322 = vmatpush1.msra.mxu0 %v101
    %1323 = vmatprep.subr.mxu0 %v98
    %1324 = vmatpush1.msra.mxu0 %v97
    %1325 = vmatprep.subr.mxu0 %v94
    %1326 = vmatpush1.msra.mxu0 %v93
    %1327 = vmatprep.subr.mxu0 %v90
    %1328 = vmatpush1.msra.mxu0 %v89
    %1329 = vmatprep.subr.mxu0 %v86
    %1330 = vmatpush1.msra.mxu0 %v85
    %1331 = vmatprep.subr.mxu0 %v82
    %1332 = vmatpush1.msra.mxu0 %v81
    %1333 = vmatprep.subr.mxu0 %v78
    %1334 = vmatpush1.msra.mxu0 %v77
    %1335 = vmatprep.subr.mxu0 %v74
    %1336 = vmatpush1.msra.mxu0 %v73
    %1337 = vmatprep.subr.mxu0 %v70
    %1338 = vmatpush1.msra.mxu0 %v69
    %1339 = vmatprep.subr.mxu0 %v66
    %1340 = vmatpush1.msra.mxu0 %v65
    %1341 = vmatprep.subr.mxu0 %v62
    %1342 = vmatpush1.msra.mxu0 %v61
    %1343 = vmatprep.subr.mxu0 %v58
    %1344 = vmatpush1.msra.mxu0 %v57
    %1345 = vmatprep.subr.mxu0 %v54
    %1346 = vmatpush1.msra.mxu0 %v53
    %1347 = vmatprep.subr.mxu0 %v50
    %1348 = vmatpush1.msra.mxu0 %v49
    %1349 = vmatprep.subr.mxu0 %v46
    %1350 = vmatpush1.msra.mxu0 %v45
    %1351 = vmatprep.subr.mxu0 %v42
    %1352 = vmatpush1.msra.mxu0 %v41
    %1353 = vmatprep.subr.mxu0 0.0
    %1354 = vmatpush2.msra.mxu0 0.0
    %1355 = vmatprep.subr.mxu0 0.0
    %1356 = vmatpush2.msra.mxu0 0.0
    %1357 = vmatprep.subr.mxu0 0.0
    %1358 = vmatpush2.msra.mxu0 0.0
    %1359 = vmatprep.subr.mxu0 0.0
    %1360 = vmatpush2.msra.mxu0 0.0
    %1361 = vmatprep.subr.mxu0 0.0
    %1362 = vmatpush2.msra.mxu0 0.0
    %1363 = vmatprep.subr.mxu0 0.0
    %1364 = vmatpush2.msra.mxu0 0.0
    %1365 = vmatprep.subr.mxu0 0.0
    %1366 = vmatpush2.msra.mxu0 0.0
    %1367 = vmatprep.subr.mxu0 0.0
    %1368 = vmatpush2.msra.mxu0 0.0
    %1369 = vmatprep.subr.mxu0 0.0
    %1370 = vmatpush2.msra.mxu0 0.0
    %1371 = vmatprep.subr.mxu0 0.0
    %1372 = vmatpush2.msra.mxu0 0.0
    %1373 = vmatprep.subr.mxu0 0.0
    %1374 = vmatpush2.msra.mxu0 0.0
    %1375 = vmatprep.subr.mxu0 0.0
    %1376 = vmatpush2.msra.mxu0 0.0
    %1377 = vmatprep.subr.mxu0 0.0
    %1378 = vmatpush2.msra.mxu0 0.0
    %1379 = vmatprep.subr.mxu0 0.0
    %1380 = vmatpush2.msra.mxu0 0.0
    %1381 = vmatprep.subr.mxu0 0.0
    %1382 = vmatpush2.msra.mxu0 0.0
    %1383 = vmatprep.subr.mxu0 0.0
    %1384 = vmatpush2.msra.mxu0 0.0
    %1385 = vmatprep.mubr.f32.mxu0 0.0
    %1386 = vmatmul.mubr.f32.gmra.mxu0 %v1102
    %v1387 = vpop.f32.mrf.mxu0
    %v1388 = vadd.f32 0.0, %v1387
    %v1389 = vpop.f32.mrf.mxu0
    %v1390 = vadd.f32 0.0, %v1389
    %1391 = vdwg.mxu0
    %v1392 = vadd.f32 %v1175, %v1317
    %v1393 = vadd.f32 %v1177, %v1319
    %v1394 = vadd.f32 %v1246, %v1388
    %v1395 = vadd.f32 %v1248, %v1390
    %v1396 = vxor.u32 %v1392, 2147483648
    %v1397 = vmul.f32 %v1396, 1.442695
    %v1398 = vpow.pop %v1397
    %v1399 = vadd.f32 %v1398, 1.0
    %v1400 = vrcp.pop %v1399
    %v1401 = vmul.f32 1.0, %v1400
    %v1402 = vxor.u32 %v1393, 2147483648
    %v1403 = vmul.f32 %v1402, 1.442695
    %v1404 = vpow.pop %v1403
    %v1405 = vadd.f32 %v1404, 1.0
    %v1406 = vrcp.pop %v1405
    %v1407 = vmul.f32 1.0, %v1406
    %v1408 = vtanh.pop %v1394
    %v1409 = vxor.u32 %v1395, 2147483648
    %v1410 = vmul.f32 %v1409, 1.442695
    %v1411 = vpow.pop %v1410
    %v1412 = vadd.f32 %v1411, 1.0
    %v1413 = vrcp.pop %v1412
    %v1414 = vmul.f32 1.0, %v1413
    %v1415 = vmul.f32 %v1407, %v1100
    %v1416 = vmul.f32 %v1401, %v1408
    %v1417 = vadd.f32 %v1415, %v1416
    %v1418 = vtanh.pop %v1417
    %v1419 = vmul.f32 %v1414, %v1418
    %s1420 = scalar_lea.vmem %s0, 8
    %v1421 = vld [vmem:[%s1420] sm:$0x3]
    %v1423 = vsel %vm144, %v1421, 0
    %1425 = vmatprep.subr.mxu0 0.0
    %1426 = vmatpush1.msra.mxu0 0.0
    %1427 = vmatprep.subr.mxu0 0.0
    %1428 = vmatpush1.msra.mxu0 0.0
    %1429 = vmatprep.subr.mxu0 0.0
    %1430 = vmatpush1.msra.mxu0 0.0
    %1431 = vmatprep.subr.mxu0 0.0
    %1432 = vmatpush1.msra.mxu0 0.0
    %1433 = vmatprep.subr.mxu0 0.0
    %1434 = vmatpush1.msra.mxu0 0.0
    %1435 = vmatprep.subr.mxu0 0.0
    %1436 = vmatpush1.msra.mxu0 0.0
    %1437 = vmatprep.subr.mxu0 0.0
    %1438 = vmatpush1.msra.mxu0 0.0
    %1439 = vmatprep.subr.mxu0 0.0
    %1440 = vmatpush1.msra.mxu0 0.0
    %1441 = vmatprep.subr.mxu0 0.0
    %1442 = vmatpush1.msra.mxu0 0.0
    %1443 = vmatprep.subr.mxu0 0.0
    %1444 = vmatpush1.msra.mxu0 0.0
    %1445 = vmatprep.subr.mxu0 0.0
    %1446 = vmatpush1.msra.mxu0 0.0
    %1447 = vmatprep.subr.mxu0 0.0
    %1448 = vmatpush1.msra.mxu0 0.0
    %1449 = vmatprep.subr.mxu0 0.0
    %1450 = vmatpush1.msra.mxu0 0.0
    %1451 = vmatprep.subr.mxu0 0.0
    %1452 = vmatpush1.msra.mxu0 0.0
    %1453 = vmatprep.subr.mxu0 0.0
    %1454 = vmatpush1.msra.mxu0 0.0
    %1455 = vmatprep.subr.mxu0 %v151
    %1456 = vmatpush1.msra.mxu0 %v149
    %1457 = vmatprep.subr.mxu0 0.0
    %1458 = vmatpush2.msra.mxu0 0.0
    %1459 = vmatprep.subr.mxu0 0.0
    %1460 = vmatpush2.msra.mxu0 0.0
    %1461 = vmatprep.subr.mxu0 0.0
    %1462 = vmatpush2.msra.mxu0 0.0
    %1463 = vmatprep.subr.mxu0 0.0
    %1464 = vmatpush2.msra.mxu0 0.0
    %1465 = vmatprep.subr.mxu0 0.0
    %1466 = vmatpush2.msra.mxu0 0.0
    %1467 = vmatprep.subr.mxu0 0.0
    %1468 = vmatpush2.msra.mxu0 0.0
    %1469 = vmatprep.subr.mxu0 0.0
    %1470 = vmatpush2.msra.mxu0 0.0
    %1471 = vmatprep.subr.mxu0 0.0
    %1472 = vmatpush2.msra.mxu0 0.0
    %1473 = vmatprep.subr.mxu0 0.0
    %1474 = vmatpush2.msra.mxu0 0.0
    %1475 = vmatprep.subr.mxu0 0.0
    %1476 = vmatpush2.msra.mxu0 0.0
    %1477 = vmatprep.subr.mxu0 0.0
    %1478 = vmatpush2.msra.mxu0 0.0
    %1479 = vmatprep.subr.mxu0 0.0
    %1480 = vmatpush2.msra.mxu0 0.0
    %1481 = vmatprep.subr.mxu0 0.0
    %1482 = vmatpush2.msra.mxu0 0.0
    %1483 = vmatprep.subr.mxu0 0.0
    %1484 = vmatpush2.msra.mxu0 0.0
    %1485 = vmatprep.subr.mxu0 0.0
    %1486 = vmatpush2.msra.mxu0 0.0
    %1487 = vmatprep.subr.mxu0 0.0
    %1488 = vmatpush2.msra.mxu0 0.0
    %1489 = vmatprep.mubr.f32.mxu0 0.0
    %1490 = vmatmul.mubr.f32.gmra.mxu0 %v1423
    %v1491 = vpop.f32.mrf.mxu0
    %v1492 = vadd.f32 %v109, %v1491
    %v1493 = vpop.f32.mrf.mxu0
    %v1494 = vadd.f32 %v113, %v1493
    %1495 = vdwg.mxu0
    %1496 = vmatprep.subr.mxu0 0.0
    %1497 = vmatpush1.msra.mxu0 0.0
    %1498 = vmatprep.subr.mxu0 0.0
    %1499 = vmatpush1.msra.mxu0 0.0
    %1500 = vmatprep.subr.mxu0 0.0
    %1501 = vmatpush1.msra.mxu0 0.0
    %1502 = vmatprep.subr.mxu0 0.0
    %1503 = vmatpush1.msra.mxu0 0.0
    %1504 = vmatprep.subr.mxu0 0.0
    %1505 = vmatpush1.msra.mxu0 0.0
    %1506 = vmatprep.subr.mxu0 0.0
    %1507 = vmatpush1.msra.mxu0 0.0
    %1508 = vmatprep.subr.mxu0 0.0
    %1509 = vmatpush1.msra.mxu0 0.0
    %1510 = vmatprep.subr.mxu0 0.0
    %1511 = vmatpush1.msra.mxu0 0.0
    %1512 = vmatprep.subr.mxu0 0.0
    %1513 = vmatpush1.msra.mxu0 0.0
    %1514 = vmatprep.subr.mxu0 0.0
    %1515 = vmatpush1.msra.mxu0 0.0
    %1516 = vmatprep.subr.mxu0 0.0
    %1517 = vmatpush1.msra.mxu0 0.0
    %1518 = vmatprep.subr.mxu0 0.0
    %1519 = vmatpush1.msra.mxu0 0.0
    %1520 = vmatprep.subr.mxu0 0.0
    %1521 = vmatpush1.msra.mxu0 0.0
    %1522 = vmatprep.subr.mxu0 0.0
    %1523 = vmatpush1.msra.mxu0 0.0
    %1524 = vmatprep.subr.mxu0 0.0
    %1525 = vmatpush1.msra.mxu0 0.0
    %1526 = vmatprep.subr.mxu0 %v155
    %1527 = vmatpush1.msra.mxu0 %v153
    %1528 = vmatprep.subr.mxu0 0.0
    %1529 = vmatpush2.msra.mxu0 0.0
    %1530 = vmatprep.subr.mxu0 0.0
    %1531 = vmatpush2.msra.mxu0 0.0
    %1532 = vmatprep.subr.mxu0 0.0
    %1533 = vmatpush2.msra.mxu0 0.0
    %1534 = vmatprep.subr.mxu0 0.0
    %1535 = vmatpush2.msra.mxu0 0.0
    %1536 = vmatprep.subr.mxu0 0.0
    %1537 = vmatpush2.msra.mxu0 0.0
    %1538 = vmatprep.subr.mxu0 0.0
    %1539 = vmatpush2.msra.mxu0 0.0
    %1540 = vmatprep.subr.mxu0 0.0
    %1541 = vmatpush2.msra.mxu0 0.0
    %1542 = vmatprep.subr.mxu0 0.0
    %1543 = vmatpush2.msra.mxu0 0.0
    %1544 = vmatprep.subr.mxu0 0.0
    %1545 = vmatpush2.msra.mxu0 0.0
    %1546 = vmatprep.subr.mxu0 0.0
    %1547 = vmatpush2.msra.mxu0 0.0
    %1548 = vmatprep.subr.mxu0 0.0
    %1549 = vmatpush2.msra.mxu0 0.0
    %1550 = vmatprep.subr.mxu0 0.0
    %1551 = vmatpush2.msra.mxu0 0.0
    %1552 = vmatprep.subr.mxu0 0.0
    %1553 = vmatpush2.msra.mxu0 0.0
    %1554 = vmatprep.subr.mxu0 0.0
    %1555 = vmatpush2.msra.mxu0 0.0
    %1556 = vmatprep.subr.mxu0 0.0
    %1557 = vmatpush2.msra.mxu0 0.0
    %1558 = vmatprep.subr.mxu0 0.0
    %1559 = vmatpush2.msra.mxu0 0.0
    %1560 = vmatprep.mubr.f32.mxu0 0.0
    %1561 = vmatmul.mubr.f32.gmra.mxu0 %v1423
    %v1562 = vpop.f32.mrf.mxu0
    %v1563 = vadd.f32 %v117, %v1562
    %v1564 = vpop.f32.mrf.mxu0
    %v1565 = vadd.f32 %v121, %v1564
    %1566 = vdwg.mxu0
    %1567 = vmatprep.subr.mxu0 %v100
    %1568 = vmatpush1.msra.mxu0 %v99
    %1569 = vmatprep.subr.mxu0 %v96
    %1570 = vmatpush1.msra.mxu0 %v95
    %1571 = vmatprep.subr.mxu0 %v92
    %1572 = vmatpush1.msra.mxu0 %v91
    %1573 = vmatprep.subr.mxu0 %v88
    %1574 = vmatpush1.msra.mxu0 %v87
    %1575 = vmatprep.subr.mxu0 %v84
    %1576 = vmatpush1.msra.mxu0 %v83
    %1577 = vmatprep.subr.mxu0 %v80
    %1578 = vmatpush1.msra.mxu0 %v79
    %1579 = vmatprep.subr.mxu0 %v76
    %1580 = vmatpush1.msra.mxu0 %v75
    %1581 = vmatprep.subr.mxu0 %v72
    %1582 = vmatpush1.msra.mxu0 %v71
    %1583 = vmatprep.subr.mxu0 %v68
    %1584 = vmatpush1.msra.mxu0 %v67
    %1585 = vmatprep.subr.mxu0 %v64
    %1586 = vmatpush1.msra.mxu0 %v63
    %1587 = vmatprep.subr.mxu0 %v60
    %1588 = vmatpush1.msra.mxu0 %v59
    %1589 = vmatprep.subr.mxu0 %v56
    %1590 = vmatpush1.msra.mxu0 %v55
    %1591 = vmatprep.subr.mxu0 %v52
    %1592 = vmatpush1.msra.mxu0 %v51
    %1593 = vmatprep.subr.mxu0 %v48
    %1594 = vmatpush1.msra.mxu0 %v47
    %1595 = vmatprep.subr.mxu0 %v44
    %1596 = vmatpush1.msra.mxu0 %v43
    %1597 = vmatprep.subr.mxu0 %v40
    %1598 = vmatpush1.msra.mxu0 %v39
    %1599 = vmatprep.subr.mxu0 0.0
    %1600 = vmatpush2.msra.mxu0 0.0
    %1601 = vmatprep.subr.mxu0 0.0
    %1602 = vmatpush2.msra.mxu0 0.0
    %1603 = vmatprep.subr.mxu0 0.0
    %1604 = vmatpush2.msra.mxu0 0.0
    %1605 = vmatprep.subr.mxu0 0.0
    %1606 = vmatpush2.msra.mxu0 0.0
    %1607 = vmatprep.subr.mxu0 0.0
    %1608 = vmatpush2.msra.mxu0 0.0
    %1609 = vmatprep.subr.mxu0 0.0
    %1610 = vmatpush2.msra.mxu0 0.0
    %1611 = vmatprep.subr.mxu0 0.0
    %1612 = vmatpush2.msra.mxu0 0.0
    %1613 = vmatprep.subr.mxu0 0.0
    %1614 = vmatpush2.msra.mxu0 0.0
    %1615 = vmatprep.subr.mxu0 0.0
    %1616 = vmatpush2.msra.mxu0 0.0
    %1617 = vmatprep.subr.mxu0 0.0
    %1618 = vmatpush2.msra.mxu0 0.0
    %1619 = vmatprep.subr.mxu0 0.0
    %1620 = vmatpush2.msra.mxu0 0.0
    %1621 = vmatprep.subr.mxu0 0.0
    %1622 = vmatpush2.msra.mxu0 0.0
    %1623 = vmatprep.subr.mxu0 0.0
    %1624 = vmatpush2.msra.mxu0 0.0
    %1625 = vmatprep.subr.mxu0 0.0
    %1626 = vmatpush2.msra.mxu0 0.0
    %1627 = vmatprep.subr.mxu0 0.0
    %1628 = vmatpush2.msra.mxu0 0.0
    %1629 = vmatprep.subr.mxu0 0.0
    %1630 = vmatpush2.msra.mxu0 0.0
    %1631 = vmatprep.mubr.f32.mxu0 0.0
    %1632 = vmatmul.mubr.f32.gmra.mxu0 %v1419
    %v1633 = vpop.f32.mrf.mxu0
    %v1634 = vadd.f32 0.0, %v1633
    %v1635 = vpop.f32.mrf.mxu0
    %v1636 = vadd.f32 0.0, %v1635
    %1637 = vdwg.mxu0
    %1638 = vmatprep.subr.mxu0 %v102
    %1639 = vmatpush1.msra.mxu0 %v101
    %1640 = vmatprep.subr.mxu0 %v98
    %1641 = vmatpush1.msra.mxu0 %v97
    %1642 = vmatprep.subr.mxu0 %v94
    %1643 = vmatpush1.msra.mxu0 %v93
    %1644 = vmatprep.subr.mxu0 %v90
    %1645 = vmatpush1.msra.mxu0 %v89
    %1646 = vmatprep.subr.mxu0 %v86
    %1647 = vmatpush1.msra.mxu0 %v85
    %1648 = vmatprep.subr.mxu0 %v82
    %1649 = vmatpush1.msra.mxu0 %v81
    %1650 = vmatprep.subr.mxu0 %v78
    %1651 = vmatpush1.msra.mxu0 %v77
    %1652 = vmatprep.subr.mxu0 %v74
    %1653 = vmatpush1.msra.mxu0 %v73
    %1654 = vmatprep.subr.mxu0 %v70
    %1655 = vmatpush1.msra.mxu0 %v69
    %1656 = vmatprep.subr.mxu0 %v66
    %1657 = vmatpush1.msra.mxu0 %v65
    %1658 = vmatprep.subr.mxu0 %v62
    %1659 = vmatpush1.msra.mxu0 %v61
    %1660 = vmatprep.subr.mxu0 %v58
    %1661 = vmatpush1.msra.mxu0 %v57
    %1662 = vmatprep.subr.mxu0 %v54
    %1663 = vmatpush1.msra.mxu0 %v53
    %1664 = vmatprep.subr.mxu0 %v50
    %1665 = vmatpush1.msra.mxu0 %v49
    %1666 = vmatprep.subr.mxu0 %v46
    %1667 = vmatpush1.msra.mxu0 %v45
    %1668 = vmatprep.subr.mxu0 %v42
    %1669 = vmatpush1.msra.mxu0 %v41
    %1670 = vmatprep.subr.mxu0 0.0
    %1671 = vmatpush2.msra.mxu0 0.0
    %1672 = vmatprep.subr.mxu0 0.0
    %1673 = vmatpush2.msra.mxu0 0.0
    %1674 = vmatprep.subr.mxu0 0.0
    %1675 = vmatpush2.msra.mxu0 0.0
    %1676 = vmatprep.subr.mxu0 0.0
    %1677 = vmatpush2.msra.mxu0 0.0
    %1678 = vmatprep.subr.mxu0 0.0
    %1679 = vmatpush2.msra.mxu0 0.0
    %1680 = vmatprep.subr.mxu0 0.0
    %1681 = vmatpush2.msra.mxu0 0.0
    %1682 = vmatprep.subr.mxu0 0.0
    %1683 = vmatpush2.msra.mxu0 0.0
    %1684 = vmatprep.subr.mxu0 0.0
    %1685 = vmatpush2.msra.mxu0 0.0
    %1686 = vmatprep.subr.mxu0 0.0
    %1687 = vmatpush2.msra.mxu0 0.0
    %1688 = vmatprep.subr.mxu0 0.0
    %1689 = vmatpush2.msra.mxu0 0.0
    %1690 = vmatprep.subr.mxu0 0.0
    %1691 = vmatpush2.msra.mxu0 0.0
    %1692 = vmatprep.subr.mxu0 0.0
    %1693 = vmatpush2.msra.mxu0 0.0
    %1694 = vmatprep.subr.mxu0 0.0
    %1695 = vmatpush2.msra.mxu0 0.0
    %1696 = vmatprep.subr.mxu0 0.0
    %1697 = vmatpush2.msra.mxu0 0.0
    %1698 = vmatprep.subr.mxu0 0.0
    %1699 = vmatpush2.msra.mxu0 0.0
    %1700 = vmatprep.subr.mxu0 0.0
    %1701 = vmatpush2.msra.mxu0 0.0
    %1702 = vmatprep.mubr.f32.mxu0 0.0
    %1703 = vmatmul.mubr.f32.gmra.mxu0 %v1419
    %v1704 = vpop.f32.mrf.mxu0
    %v1705 = vadd.f32 0.0, %v1704
    %v1706 = vpop.f32.mrf.mxu0
    %v1707 = vadd.f32 0.0, %v1706
    %1708 = vdwg.mxu0
    %v1709 = vadd.f32 %v1492, %v1634
    %v1710 = vadd.f32 %v1494, %v1636
    %v1711 = vadd.f32 %v1563, %v1705
    %v1712 = vadd.f32 %v1565, %v1707
    %v1713 = vxor.u32 %v1709, 2147483648
    %v1714 = vmul.f32 %v1713, 1.442695
    %v1715 = vpow.pop %v1714
    %v1716 = vadd.f32 %v1715, 1.0
    %v1717 = vrcp.pop %v1716
    %v1718 = vmul.f32 1.0, %v1717
    %v1719 = vxor.u32 %v1710, 2147483648
    %v1720 = vmul.f32 %v1719, 1.442695
    %v1721 = vpow.pop %v1720
    %v1722 = vadd.f32 %v1721, 1.0
    %v1723 = vrcp.pop %v1722
    %v1724 = vmul.f32 1.0, %v1723
    %v1725 = vtanh.pop %v1711
    %v1726 = vxor.u32 %v1712, 2147483648
    %v1727 = vmul.f32 %v1726, 1.442695
    %v1728 = vpow.pop %v1727
    %v1729 = vadd.f32 %v1728, 1.0
    %v1730 = vrcp.pop %v1729
    %v1731 = vmul.f32 1.0, %v1730
    %v1732 = vmul.f32 %v1724, %v1417
    %v1733 = vmul.f32 %v1718, %v1725
    %v1734 = vadd.f32 %v1732, %v1733
    %v1735 = vtanh.pop %v1734
    %v1736 = vmul.f32 %v1731, %v1735
    %s1737 = scalar_lea.vmem %s0, 10
    %v1738 = vld [vmem:[%s1737] sm:$0x3]
    %v1740 = vsel %vm144, %v1738, 0
    %1742 = vmatprep.subr.mxu0 0.0
    %1743 = vmatpush1.msra.mxu0 0.0
    %1744 = vmatprep.subr.mxu0 0.0
    %1745 = vmatpush1.msra.mxu0 0.0
    %1746 = vmatprep.subr.mxu0 0.0
    %1747 = vmatpush1.msra.mxu0 0.0
    %1748 = vmatprep.subr.mxu0 0.0
    %1749 = vmatpush1.msra.mxu0 0.0
    %1750 = vmatprep.subr.mxu0 0.0
    %1751 = vmatpush1.msra.mxu0 0.0
    %1752 = vmatprep.subr.mxu0 0.0
    %1753 = vmatpush1.msra.mxu0 0.0
    %1754 = vmatprep.subr.mxu0 0.0
    %1755 = vmatpush1.msra.mxu0 0.0
    %1756 = vmatprep.subr.mxu0 0.0
    %1757 = vmatpush1.msra.mxu0 0.0
    %1758 = vmatprep.subr.mxu0 0.0
    %1759 = vmatpush1.msra.mxu0 0.0
    %1760 = vmatprep.subr.mxu0 0.0
    %1761 = vmatpush1.msra.mxu0 0.0
    %1762 = vmatprep.subr.mxu0 0.0
    %1763 = vmatpush1.msra.mxu0 0.0
    %1764 = vmatprep.subr.mxu0 0.0
    %1765 = vmatpush1.msra.mxu0 0.0
    %1766 = vmatprep.subr.mxu0 0.0
    %1767 = vmatpush1.msra.mxu0 0.0
    %1768 = vmatprep.subr.mxu0 0.0
    %1769 = vmatpush1.msra.mxu0 0.0
    %1770 = vmatprep.subr.mxu0 0.0
    %1771 = vmatpush1.msra.mxu0 0.0
    %1772 = vmatprep.subr.mxu0 %v151
    %1773 = vmatpush1.msra.mxu0 %v149
    %1774 = vmatprep.subr.mxu0 0.0
    %1775 = vmatpush2.msra.mxu0 0.0
    %1776 = vmatprep.subr.mxu0 0.0
    %1777 = vmatpush2.msra.mxu0 0.0
    %1778 = vmatprep.subr.mxu0 0.0
    %1779 = vmatpush2.msra.mxu0 0.0
    %1780 = vmatprep.subr.mxu0 0.0
    %1781 = vmatpush2.msra.mxu0 0.0
    %1782 = vmatprep.subr.mxu0 0.0
    %1783 = vmatpush2.msra.mxu0 0.0
    %1784 = vmatprep.subr.mxu0 0.0
    %1785 = vmatpush2.msra.mxu0 0.0
    %1786 = vmatprep.subr.mxu0 0.0
    %1787 = vmatpush2.msra.mxu0 0.0
    %1788 = vmatprep.subr.mxu0 0.0
    %1789 = vmatpush2.msra.mxu0 0.0
    %1790 = vmatprep.subr.mxu0 0.0
    %1791 = vmatpush2.msra.mxu0 0.0
    %1792 = vmatprep.subr.mxu0 0.0
    %1793 = vmatpush2.msra.mxu0 0.0
    %1794 = vmatprep.subr.mxu0 0.0
    %1795 = vmatpush2.msra.mxu0 0.0
    %1796 = vmatprep.subr.mxu0 0.0
    %1797 = vmatpush2.msra.mxu0 0.0
    %1798 = vmatprep.subr.mxu0 0.0
    %1799 = vmatpush2.msra.mxu0 0.0
    %1800 = vmatprep.subr.mxu0 0.0
    %1801 = vmatpush2.msra.mxu0 0.0
    %1802 = vmatprep.subr.mxu0 0.0
    %1803 = vmatpush2.msra.mxu0 0.0
    %1804 = vmatprep.subr.mxu0 0.0
    %1805 = vmatpush2.msra.mxu0 0.0
    %1806 = vmatprep.mubr.f32.mxu0 0.0
    %1807 = vmatmul.mubr.f32.gmra.mxu0 %v1740
    %v1808 = vpop.f32.mrf.mxu0
    %v1809 = vadd.f32 %v109, %v1808
    %v1810 = vpop.f32.mrf.mxu0
    %v1811 = vadd.f32 %v113, %v1810
    %1812 = vdwg.mxu0
    %1813 = vmatprep.subr.mxu0 0.0
    %1814 = vmatpush1.msra.mxu0 0.0
    %1815 = vmatprep.subr.mxu0 0.0
    %1816 = vmatpush1.msra.mxu0 0.0
    %1817 = vmatprep.subr.mxu0 0.0
    %1818 = vmatpush1.msra.mxu0 0.0
    %1819 = vmatprep.subr.mxu0 0.0
    %1820 = vmatpush1.msra.mxu0 0.0
    %1821 = vmatprep.subr.mxu0 0.0
    %1822 = vmatpush1.msra.mxu0 0.0
    %1823 = vmatprep.subr.mxu0 0.0
    %1824 = vmatpush1.msra.mxu0 0.0
    %1825 = vmatprep.subr.mxu0 0.0
    %1826 = vmatpush1.msra.mxu0 0.0
    %1827 = vmatprep.subr.mxu0 0.0
    %1828 = vmatpush1.msra.mxu0 0.0
    %1829 = vmatprep.subr.mxu0 0.0
    %1830 = vmatpush1.msra.mxu0 0.0
    %1831 = vmatprep.subr.mxu0 0.0
    %1832 = vmatpush1.msra.mxu0 0.0
    %1833 = vmatprep.subr.mxu0 0.0
    %1834 = vmatpush1.msra.mxu0 0.0
    %1835 = vmatprep.subr.mxu0 0.0
    %1836 = vmatpush1.msra.mxu0 0.0
    %1837 = vmatprep.subr.mxu0 0.0
    %1838 = vmatpush1.msra.mxu0 0.0
    %1839 = vmatprep.subr.mxu0 0.0
    %1840 = vmatpush1.msra.mxu0 0.0
    %1841 = vmatprep.subr.mxu0 0.0
    %1842 = vmatpush1.msra.mxu0 0.0
    %1843 = vmatprep.subr.mxu0 %v155
    %1844 = vmatpush1.msra.mxu0 %v153
    %1845 = vmatprep.subr.mxu0 0.0
    %1846 = vmatpush2.msra.mxu0 0.0
    %1847 = vmatprep.subr.mxu0 0.0
    %1848 = vmatpush2.msra.mxu0 0.0
    %1849 = vmatprep.subr.mxu0 0.0
    %1850 = vmatpush2.msra.mxu0 0.0
    %1851 = vmatprep.subr.mxu0 0.0
    %1852 = vmatpush2.msra.mxu0 0.0
    %1853 = vmatprep.subr.mxu0 0.0
    %1854 = vmatpush2.msra.mxu0 0.0
    %1855 = vmatprep.subr.mxu0 0.0
    %1856 = vmatpush2.msra.mxu0 0.0
    %1857 = vmatprep.subr.mxu0 0.0
    %1858 = vmatpush2.msra.mxu0 0.0
    %1859 = vmatprep.subr.mxu0 0.0
    %1860 = vmatpush2.msra.mxu0 0.0
    %1861 = vmatprep.subr.mxu0 0.0
    %1862 = vmatpush2.msra.mxu0 0.0
    %1863 = vmatprep.subr.mxu0 0.0
    %1864 = vmatpush2.msra.mxu0 0.0
    %1865 = vmatprep.subr.mxu0 0.0
    %1866 = vmatpush2.msra.mxu0 0.0
    %1867 = vmatprep.subr.mxu0 0.0
    %1868 = vmatpush2.msra.mxu0 0.0
    %1869 = vmatprep.subr.mxu0 0.0
    %1870 = vmatpush2.msra.mxu0 0.0
    %1871 = vmatprep.subr.mxu0 0.0
    %1872 = vmatpush2.msra.mxu0 0.0
    %1873 = vmatprep.subr.mxu0 0.0
    %1874 = vmatpush2.msra.mxu0 0.0
    %1875 = vmatprep.subr.mxu0 0.0
    %1876 = vmatpush2.msra.mxu0 0.0
    %1877 = vmatprep.mubr.f32.mxu0 0.0
    %1878 = vmatmul.mubr.f32.gmra.mxu0 %v1740
    %v1879 = vpop.f32.mrf.mxu0
    %v1880 = vadd.f32 %v117, %v1879
    %v1881 = vpop.f32.mrf.mxu0
    %v1882 = vadd.f32 %v121, %v1881
    %1883 = vdwg.mxu0
    %1884 = vmatprep.subr.mxu0 %v100
    %1885 = vmatpush1.msra.mxu0 %v99
    %1886 = vmatprep.subr.mxu0 %v96
    %1887 = vmatpush1.msra.mxu0 %v95
    %1888 = vmatprep.subr.mxu0 %v92
    %1889 = vmatpush1.msra.mxu0 %v91
    %1890 = vmatprep.subr.mxu0 %v88
    %1891 = vmatpush1.msra.mxu0 %v87
    %1892 = vmatprep.subr.mxu0 %v84
    %1893 = vmatpush1.msra.mxu0 %v83
    %1894 = vmatprep.subr.mxu0 %v80
    %1895 = vmatpush1.msra.mxu0 %v79
    %1896 = vmatprep.subr.mxu0 %v76
    %1897 = vmatpush1.msra.mxu0 %v75
    %1898 = vmatprep.subr.mxu0 %v72
    %1899 = vmatpush1.msra.mxu0 %v71
    %1900 = vmatprep.subr.mxu0 %v68
    %1901 = vmatpush1.msra.mxu0 %v67
    %1902 = vmatprep.subr.mxu0 %v64
    %1903 = vmatpush1.msra.mxu0 %v63
    %1904 = vmatprep.subr.mxu0 %v60
    %1905 = vmatpush1.msra.mxu0 %v59
    %1906 = vmatprep.subr.mxu0 %v56
    %1907 = vmatpush1.msra.mxu0 %v55
    %1908 = vmatprep.subr.mxu0 %v52
    %1909 = vmatpush1.msra.mxu0 %v51
    %1910 = vmatprep.subr.mxu0 %v48
    %1911 = vmatpush1.msra.mxu0 %v47
    %1912 = vmatprep.subr.mxu0 %v44
    %1913 = vmatpush1.msra.mxu0 %v43
    %1914 = vmatprep.subr.mxu0 %v40
    %1915 = vmatpush1.msra.mxu0 %v39
    %1916 = vmatprep.subr.mxu0 0.0
    %1917 = vmatpush2.msra.mxu0 0.0
    %1918 = vmatprep.subr.mxu0 0.0
    %1919 = vmatpush2.msra.mxu0 0.0
    %1920 = vmatprep.subr.mxu0 0.0
    %1921 = vmatpush2.msra.mxu0 0.0
    %1922 = vmatprep.subr.mxu0 0.0
    %1923 = vmatpush2.msra.mxu0 0.0
    %1924 = vmatprep.subr.mxu0 0.0
    %1925 = vmatpush2.msra.mxu0 0.0
    %1926 = vmatprep.subr.mxu0 0.0
    %1927 = vmatpush2.msra.mxu0 0.0
    %1928 = vmatprep.subr.mxu0 0.0
    %1929 = vmatpush2.msra.mxu0 0.0
    %1930 = vmatprep.subr.mxu0 0.0
    %1931 = vmatpush2.msra.mxu0 0.0
    %1932 = vmatprep.subr.mxu0 0.0
    %1933 = vmatpush2.msra.mxu0 0.0
    %1934 = vmatprep.subr.mxu0 0.0
    %1935 = vmatpush2.msra.mxu0 0.0
    %1936 = vmatprep.subr.mxu0 0.0
    %1937 = vmatpush2.msra.mxu0 0.0
    %1938 = vmatprep.subr.mxu0 0.0
    %1939 = vmatpush2.msra.mxu0 0.0
    %1940 = vmatprep.subr.mxu0 0.0
    %1941 = vmatpush2.msra.mxu0 0.0
    %1942 = vmatprep.subr.mxu0 0.0
    %1943 = vmatpush2.msra.mxu0 0.0
    %1944 = vmatprep.subr.mxu0 0.0
    %1945 = vmatpush2.msra.mxu0 0.0
    %1946 = vmatprep.subr.mxu0 0.0
    %1947 = vmatpush2.msra.mxu0 0.0
    %1948 = vmatprep.mubr.f32.mxu0 0.0
    %1949 = vmatmul.mubr.f32.gmra.mxu0 %v1736
    %v1950 = vpop.f32.mrf.mxu0
    %v1951 = vadd.f32 0.0, %v1950
    %v1952 = vpop.f32.mrf.mxu0
    %v1953 = vadd.f32 0.0, %v1952
    %1954 = vdwg.mxu0
    %1955 = vmatprep.subr.mxu0 %v102
    %1956 = vmatpush1.msra.mxu0 %v101
    %1957 = vmatprep.subr.mxu0 %v98
    %1958 = vmatpush1.msra.mxu0 %v97
    %1959 = vmatprep.subr.mxu0 %v94
    %1960 = vmatpush1.msra.mxu0 %v93
    %1961 = vmatprep.subr.mxu0 %v90
    %1962 = vmatpush1.msra.mxu0 %v89
    %1963 = vmatprep.subr.mxu0 %v86
    %1964 = vmatpush1.msra.mxu0 %v85
    %1965 = vmatprep.subr.mxu0 %v82
    %1966 = vmatpush1.msra.mxu0 %v81
    %1967 = vmatprep.subr.mxu0 %v78
    %1968 = vmatpush1.msra.mxu0 %v77
    %1969 = vmatprep.subr.mxu0 %v74
    %1970 = vmatpush1.msra.mxu0 %v73
    %1971 = vmatprep.subr.mxu0 %v70
    %1972 = vmatpush1.msra.mxu0 %v69
    %1973 = vmatprep.subr.mxu0 %v66
    %1974 = vmatpush1.msra.mxu0 %v65
    %1975 = vmatprep.subr.mxu0 %v62
    %1976 = vmatpush1.msra.mxu0 %v61
    %1977 = vmatprep.subr.mxu0 %v58
    %1978 = vmatpush1.msra.mxu0 %v57
    %1979 = vmatprep.subr.mxu0 %v54
    %1980 = vmatpush1.msra.mxu0 %v53
    %1981 = vmatprep.subr.mxu0 %v50
    %1982 = vmatpush1.msra.mxu0 %v49
    %1983 = vmatprep.subr.mxu0 %v46
    %1984 = vmatpush1.msra.mxu0 %v45
    %1985 = vmatprep.subr.mxu0 %v42
    %1986 = vmatpush1.msra.mxu0 %v41
    %1987 = vmatprep.subr.mxu0 0.0
    %1988 = vmatpush2.msra.mxu0 0.0
    %1989 = vmatprep.subr.mxu0 0.0
    %1990 = vmatpush2.msra.mxu0 0.0
    %1991 = vmatprep.subr.mxu0 0.0
    %1992 = vmatpush2.msra.mxu0 0.0
    %1993 = vmatprep.subr.mxu0 0.0
    %1994 = vmatpush2.msra.mxu0 0.0
    %1995 = vmatprep.subr.mxu0 0.0
    %1996 = vmatpush2.msra.mxu0 0.0
    %1997 = vmatprep.subr.mxu0 0.0
    %1998 = vmatpush2.msra.mxu0 0.0
    %1999 = vmatprep.subr.mxu0 0.0
    %2000 = vmatpush2.msra.mxu0 0.0
    %2001 = vmatprep.subr.mxu0 0.0
    %2002 = vmatpush2.msra.mxu0 0.0
    %2003 = vmatprep.subr.mxu0 0.0
    %2004 = vmatpush2.msra.mxu0 0.0
    %2005 = vmatprep.subr.mxu0 0.0
    %2006 = vmatpush2.msra.mxu0 0.0
    %2007 = vmatprep.subr.mxu0 0.0
    %2008 = vmatpush2.msra.mxu0 0.0
    %2009 = vmatprep.subr.mxu0 0.0
    %2010 = vmatpush2.msra.mxu0 0.0
    %2011 = vmatprep.subr.mxu0 0.0
    %2012 = vmatpush2.msra.mxu0 0.0
    %2013 = vmatprep.subr.mxu0 0.0
    %2014 = vmatpush2.msra.mxu0 0.0
    %2015 = vmatprep.subr.mxu0 0.0
    %2016 = vmatpush2.msra.mxu0 0.0
    %2017 = vmatprep.subr.mxu0 0.0
    %2018 = vmatpush2.msra.mxu0 0.0
    %2019 = vmatprep.mubr.f32.mxu0 0.0
    %2020 = vmatmul.mubr.f32.gmra.mxu0 %v1736
    %v2021 = vpop.f32.mrf.mxu0
    %v2022 = vadd.f32 0.0, %v2021
    %v2023 = vpop.f32.mrf.mxu0
    %v2024 = vadd.f32 0.0, %v2023
    %2025 = vdwg.mxu0
    %v2026 = vadd.f32 %v1809, %v1951
    %v2027 = vadd.f32 %v1811, %v1953
    %v2028 = vadd.f32 %v1880, %v2022
    %v2029 = vadd.f32 %v1882, %v2024
    %v2030 = vxor.u32 %v2026, 2147483648
    %v2031 = vmul.f32 %v2030, 1.442695
    %v2032 = vpow.pop %v2031
    %v2033 = vadd.f32 %v2032, 1.0
    %v2034 = vrcp.pop %v2033
    %v2035 = vmul.f32 1.0, %v2034
    %v2036 = vxor.u32 %v2027, 2147483648
    %v2037 = vmul.f32 %v2036, 1.442695
    %v2038 = vpow.pop %v2037
    %v2039 = vadd.f32 %v2038, 1.0
    %v2040 = vrcp.pop %v2039
    %v2041 = vmul.f32 1.0, %v2040
    %v2042 = vtanh.pop %v2028
    %v2043 = vxor.u32 %v2029, 2147483648
    %v2044 = vmul.f32 %v2043, 1.442695
    %v2045 = vpow.pop %v2044
    %v2046 = vadd.f32 %v2045, 1.0
    %v2047 = vrcp.pop %v2046
    %v2048 = vmul.f32 1.0, %v2047
    %v2049 = vmul.f32 %v2041, %v1734
    %v2050 = vmul.f32 %v2035, %v2042
    %v2051 = vadd.f32 %v2049, %v2050
    %v2052 = vtanh.pop %v2051
    %v2053 = vmul.f32 %v2048, %v2052
    %s2054 = scalar_lea.vmem %s0, 12
    %v2055 = vld [vmem:[%s2054] sm:$0x3]
    %v2057 = vsel %vm144, %v2055, 0
    %2059 = vmatprep.subr.mxu0 0.0
    %2060 = vmatpush1.msra.mxu0 0.0
    %2061 = vmatprep.subr.mxu0 0.0
    %2062 = vmatpush1.msra.mxu0 0.0
    %2063 = vmatprep.subr.mxu0 0.0
    %2064 = vmatpush1.msra.mxu0 0.0
    %2065 = vmatprep.subr.mxu0 0.0
    %2066 = vmatpush1.msra.mxu0 0.0
    %2067 = vmatprep.subr.mxu0 0.0
    %2068 = vmatpush1.msra.mxu0 0.0
    %2069 = vmatprep.subr.mxu0 0.0
    %2070 = vmatpush1.msra.mxu0 0.0
    %2071 = vmatprep.subr.mxu0 0.0
    %2072 = vmatpush1.msra.mxu0 0.0
    %2073 = vmatprep.subr.mxu0 0.0
    %2074 = vmatpush1.msra.mxu0 0.0
    %2075 = vmatprep.subr.mxu0 0.0
    %2076 = vmatpush1.msra.mxu0 0.0
    %2077 = vmatprep.subr.mxu0 0.0
    %2078 = vmatpush1.msra.mxu0 0.0
    %2079 = vmatprep.subr.mxu0 0.0
    %2080 = vmatpush1.msra.mxu0 0.0
    %2081 = vmatprep.subr.mxu0 0.0
    %2082 = vmatpush1.msra.mxu0 0.0
    %2083 = vmatprep.subr.mxu0 0.0
    %2084 = vmatpush1.msra.mxu0 0.0
    %2085 = vmatprep.subr.mxu0 0.0
    %2086 = vmatpush1.msra.mxu0 0.0
    %2087 = vmatprep.subr.mxu0 0.0
    %2088 = vmatpush1.msra.mxu0 0.0
    %2089 = vmatprep.subr.mxu0 %v151
    %2090 = vmatpush1.msra.mxu0 %v149
    %2091 = vmatprep.subr.mxu0 0.0
    %2092 = vmatpush2.msra.mxu0 0.0
    %2093 = vmatprep.subr.mxu0 0.0
    %2094 = vmatpush2.msra.mxu0 0.0
    %2095 = vmatprep.subr.mxu0 0.0
    %2096 = vmatpush2.msra.mxu0 0.0
    %2097 = vmatprep.subr.mxu0 0.0
    %2098 = vmatpush2.msra.mxu0 0.0
    %2099 = vmatprep.subr.mxu0 0.0
    %2100 = vmatpush2.msra.mxu0 0.0
    %2101 = vmatprep.subr.mxu0 0.0
    %2102 = vmatpush2.msra.mxu0 0.0
    %2103 = vmatprep.subr.mxu0 0.0
    %2104 = vmatpush2.msra.mxu0 0.0
    %2105 = vmatprep.subr.mxu0 0.0
    %2106 = vmatpush2.msra.mxu0 0.0
    %2107 = vmatprep.subr.mxu0 0.0
    %2108 = vmatpush2.msra.mxu0 0.0
    %2109 = vmatprep.subr.mxu0 0.0
    %2110 = vmatpush2.msra.mxu0 0.0
    %2111 = vmatprep.subr.mxu0 0.0
    %2112 = vmatpush2.msra.mxu0 0.0
    %2113 = vmatprep.subr.mxu0 0.0
    %2114 = vmatpush2.msra.mxu0 0.0
    %2115 = vmatprep.subr.mxu0 0.0
    %2116 = vmatpush2.msra.mxu0 0.0
    %2117 = vmatprep.subr.mxu0 0.0
    %2118 = vmatpush2.msra.mxu0 0.0
    %2119 = vmatprep.subr.mxu0 0.0
    %2120 = vmatpush2.msra.mxu0 0.0
    %2121 = vmatprep.subr.mxu0 0.0
    %2122 = vmatpush2.msra.mxu0 0.0
    %2123 = vmatprep.mubr.f32.mxu0 0.0
    %2124 = vmatmul.mubr.f32.gmra.mxu0 %v2057
    %v2125 = vpop.f32.mrf.mxu0
    %v2126 = vadd.f32 %v109, %v2125
    %v2127 = vpop.f32.mrf.mxu0
    %v2128 = vadd.f32 %v113, %v2127
    %2129 = vdwg.mxu0
    %2130 = vmatprep.subr.mxu0 0.0
    %2131 = vmatpush1.msra.mxu0 0.0
    %2132 = vmatprep.subr.mxu0 0.0
    %2133 = vmatpush1.msra.mxu0 0.0
    %2134 = vmatprep.subr.mxu0 0.0
    %2135 = vmatpush1.msra.mxu0 0.0
    %2136 = vmatprep.subr.mxu0 0.0
    %2137 = vmatpush1.msra.mxu0 0.0
    %2138 = vmatprep.subr.mxu0 0.0
    %2139 = vmatpush1.msra.mxu0 0.0
    %2140 = vmatprep.subr.mxu0 0.0
    %2141 = vmatpush1.msra.mxu0 0.0
    %2142 = vmatprep.subr.mxu0 0.0
    %2143 = vmatpush1.msra.mxu0 0.0
    %2144 = vmatprep.subr.mxu0 0.0
    %2145 = vmatpush1.msra.mxu0 0.0
    %2146 = vmatprep.subr.mxu0 0.0
    %2147 = vmatpush1.msra.mxu0 0.0
    %2148 = vmatprep.subr.mxu0 0.0
    %2149 = vmatpush1.msra.mxu0 0.0
    %2150 = vmatprep.subr.mxu0 0.0
    %2151 = vmatpush1.msra.mxu0 0.0
    %2152 = vmatprep.subr.mxu0 0.0
    %2153 = vmatpush1.msra.mxu0 0.0
    %2154 = vmatprep.subr.mxu0 0.0
    %2155 = vmatpush1.msra.mxu0 0.0
    %2156 = vmatprep.subr.mxu0 0.0
    %2157 = vmatpush1.msra.mxu0 0.0
    %2158 = vmatprep.subr.mxu0 0.0
    %2159 = vmatpush1.msra.mxu0 0.0
    %2160 = vmatprep.subr.mxu0 %v155
    %2161 = vmatpush1.msra.mxu0 %v153
    %2162 = vmatprep.subr.mxu0 0.0
    %2163 = vmatpush2.msra.mxu0 0.0
    %2164 = vmatprep.subr.mxu0 0.0
    %2165 = vmatpush2.msra.mxu0 0.0
    %2166 = vmatprep.subr.mxu0 0.0
    %2167 = vmatpush2.msra.mxu0 0.0
    %2168 = vmatprep.subr.mxu0 0.0
    %2169 = vmatpush2.msra.mxu0 0.0
    %2170 = vmatprep.subr.mxu0 0.0
    %2171 = vmatpush2.msra.mxu0 0.0
    %2172 = vmatprep.subr.mxu0 0.0
    %2173 = vmatpush2.msra.mxu0 0.0
    %2174 = vmatprep.subr.mxu0 0.0
    %2175 = vmatpush2.msra.mxu0 0.0
    %2176 = vmatprep.subr.mxu0 0.0
    %2177 = vmatpush2.msra.mxu0 0.0
    %2178 = vmatprep.subr.mxu0 0.0
    %2179 = vmatpush2.msra.mxu0 0.0
    %2180 = vmatprep.subr.mxu0 0.0
    %2181 = vmatpush2.msra.mxu0 0.0
    %2182 = vmatprep.subr.mxu0 0.0
    %2183 = vmatpush2.msra.mxu0 0.0
    %2184 = vmatprep.subr.mxu0 0.0
    %2185 = vmatpush2.msra.mxu0 0.0
    %2186 = vmatprep.subr.mxu0 0.0
    %2187 = vmatpush2.msra.mxu0 0.0
    %2188 = vmatprep.subr.mxu0 0.0
    %2189 = vmatpush2.msra.mxu0 0.0
    %2190 = vmatprep.subr.mxu0 0.0
    %2191 = vmatpush2.msra.mxu0 0.0
    %2192 = vmatprep.subr.mxu0 0.0
    %2193 = vmatpush2.msra.mxu0 0.0
    %2194 = vmatprep.mubr.f32.mxu0 0.0
    %2195 = vmatmul.mubr.f32.gmra.mxu0 %v2057
    %v2196 = vpop.f32.mrf.mxu0
    %v2197 = vadd.f32 %v117, %v2196
    %v2198 = vpop.f32.mrf.mxu0
    %v2199 = vadd.f32 %v121, %v2198
    %2200 = vdwg.mxu0
    %2201 = vmatprep.subr.mxu0 %v100
    %2202 = vmatpush1.msra.mxu0 %v99
    %2203 = vmatprep.subr.mxu0 %v96
    %2204 = vmatpush1.msra.mxu0 %v95
    %2205 = vmatprep.subr.mxu0 %v92
    %2206 = vmatpush1.msra.mxu0 %v91
    %2207 = vmatprep.subr.mxu0 %v88
    %2208 = vmatpush1.msra.mxu0 %v87
    %2209 = vmatprep.subr.mxu0 %v84
    %2210 = vmatpush1.msra.mxu0 %v83
    %2211 = vmatprep.subr.mxu0 %v80
    %2212 = vmatpush1.msra.mxu0 %v79
    %2213 = vmatprep.subr.mxu0 %v76
    %2214 = vmatpush1.msra.mxu0 %v75
    %2215 = vmatprep.subr.mxu0 %v72
    %2216 = vmatpush1.msra.mxu0 %v71
    %2217 = vmatprep.subr.mxu0 %v68
    %2218 = vmatpush1.msra.mxu0 %v67
    %2219 = vmatprep.subr.mxu0 %v64
    %2220 = vmatpush1.msra.mxu0 %v63
    %2221 = vmatprep.subr.mxu0 %v60
    %2222 = vmatpush1.msra.mxu0 %v59
    %2223 = vmatprep.subr.mxu0 %v56
    %2224 = vmatpush1.msra.mxu0 %v55
    %2225 = vmatprep.subr.mxu0 %v52
    %2226 = vmatpush1.msra.mxu0 %v51
    %2227 = vmatprep.subr.mxu0 %v48
    %2228 = vmatpush1.msra.mxu0 %v47
    %2229 = vmatprep.subr.mxu0 %v44
    %2230 = vmatpush1.msra.mxu0 %v43
    %2231 = vmatprep.subr.mxu0 %v40
    %2232 = vmatpush1.msra.mxu0 %v39
    %2233 = vmatprep.subr.mxu0 0.0
    %2234 = vmatpush2.msra.mxu0 0.0
    %2235 = vmatprep.subr.mxu0 0.0
    %2236 = vmatpush2.msra.mxu0 0.0
    %2237 = vmatprep.subr.mxu0 0.0
    %2238 = vmatpush2.msra.mxu0 0.0
    %2239 = vmatprep.subr.mxu0 0.0
    %2240 = vmatpush2.msra.mxu0 0.0
    %2241 = vmatprep.subr.mxu0 0.0
    %2242 = vmatpush2.msra.mxu0 0.0
    %2243 = vmatprep.subr.mxu0 0.0
    %2244 = vmatpush2.msra.mxu0 0.0
    %2245 = vmatprep.subr.mxu0 0.0
    %2246 = vmatpush2.msra.mxu0 0.0
    %2247 = vmatprep.subr.mxu0 0.0
    %2248 = vmatpush2.msra.mxu0 0.0
    %2249 = vmatprep.subr.mxu0 0.0
    %2250 = vmatpush2.msra.mxu0 0.0
    %2251 = vmatprep.subr.mxu0 0.0
    %2252 = vmatpush2.msra.mxu0 0.0
    %2253 = vmatprep.subr.mxu0 0.0
    %2254 = vmatpush2.msra.mxu0 0.0
    %2255 = vmatprep.subr.mxu0 0.0
    %2256 = vmatpush2.msra.mxu0 0.0
    %2257 = vmatprep.subr.mxu0 0.0
    %2258 = vmatpush2.msra.mxu0 0.0
    %2259 = vmatprep.subr.mxu0 0.0
    %2260 = vmatpush2.msra.mxu0 0.0
    %2261 = vmatprep.subr.mxu0 0.0
    %2262 = vmatpush2.msra.mxu0 0.0
    %2263 = vmatprep.subr.mxu0 0.0
    %2264 = vmatpush2.msra.mxu0 0.0
    %2265 = vmatprep.mubr.f32.mxu0 0.0
    %2266 = vmatmul.mubr.f32.gmra.mxu0 %v2053
    %v2267 = vpop.f32.mrf.mxu0
    %v2268 = vadd.f32 0.0, %v2267
    %v2269 = vpop.f32.mrf.mxu0
    %v2270 = vadd.f32 0.0, %v2269
    %2271 = vdwg.mxu0
    %2272 = vmatprep.subr.mxu0 %v102
    %2273 = vmatpush1.msra.mxu0 %v101
    %2274 = vmatprep.subr.mxu0 %v98
    %2275 = vmatpush1.msra.mxu0 %v97
    %2276 = vmatprep.subr.mxu0 %v94
    %2277 = vmatpush1.msra.mxu0 %v93
    %2278 = vmatprep.subr.mxu0 %v90
    %2279 = vmatpush1.msra.mxu0 %v89
    %2280 = vmatprep.subr.mxu0 %v86
    %2281 = vmatpush1.msra.mxu0 %v85
    %2282 = vmatprep.subr.mxu0 %v82
    %2283 = vmatpush1.msra.mxu0 %v81
    %2284 = vmatprep.subr.mxu0 %v78
    %2285 = vmatpush1.msra.mxu0 %v77
    %2286 = vmatprep.subr.mxu0 %v74
    %2287 = vmatpush1.msra.mxu0 %v73
    %2288 = vmatprep.subr.mxu0 %v70
    %2289 = vmatpush1.msra.mxu0 %v69
    %2290 = vmatprep.subr.mxu0 %v66
    %2291 = vmatpush1.msra.mxu0 %v65
    %2292 = vmatprep.subr.mxu0 %v62
    %2293 = vmatpush1.msra.mxu0 %v61
    %2294 = vmatprep.subr.mxu0 %v58
    %2295 = vmatpush1.msra.mxu0 %v57
    %2296 = vmatprep.subr.mxu0 %v54
    %2297 = vmatpush1.msra.mxu0 %v53
    %2298 = vmatprep.subr.mxu0 %v50
    %2299 = vmatpush1.msra.mxu0 %v49
    %2300 = vmatprep.subr.mxu0 %v46
    %2301 = vmatpush1.msra.mxu0 %v45
    %2302 = vmatprep.subr.mxu0 %v42
    %2303 = vmatpush1.msra.mxu0 %v41
    %2304 = vmatprep.subr.mxu0 0.0
    %2305 = vmatpush2.msra.mxu0 0.0
    %2306 = vmatprep.subr.mxu0 0.0
    %2307 = vmatpush2.msra.mxu0 0.0
    %2308 = vmatprep.subr.mxu0 0.0
    %2309 = vmatpush2.msra.mxu0 0.0
    %2310 = vmatprep.subr.mxu0 0.0
    %2311 = vmatpush2.msra.mxu0 0.0
    %2312 = vmatprep.subr.mxu0 0.0
    %2313 = vmatpush2.msra.mxu0 0.0
    %2314 = vmatprep.subr.mxu0 0.0
    %2315 = vmatpush2.msra.mxu0 0.0
    %2316 = vmatprep.subr.mxu0 0.0
    %2317 = vmatpush2.msra.mxu0 0.0
    %2318 = vmatprep.subr.mxu0 0.0
    %2319 = vmatpush2.msra.mxu0 0.0
    %2320 = vmatprep.subr.mxu0 0.0
    %2321 = vmatpush2.msra.mxu0 0.0
    %2322 = vmatprep.subr.mxu0 0.0
    %2323 = vmatpush2.msra.mxu0 0.0
    %2324 = vmatprep.subr.mxu0 0.0
    %2325 = vmatpush2.msra.mxu0 0.0
    %2326 = vmatprep.subr.mxu0 0.0
    %2327 = vmatpush2.msra.mxu0 0.0
    %2328 = vmatprep.subr.mxu0 0.0
    %2329 = vmatpush2.msra.mxu0 0.0
    %2330 = vmatprep.subr.mxu0 0.0
    %2331 = vmatpush2.msra.mxu0 0.0
    %2332 = vmatprep.subr.mxu0 0.0
    %2333 = vmatpush2.msra.mxu0 0.0
    %2334 = vmatprep.subr.mxu0 0.0
    %2335 = vmatpush2.msra.mxu0 0.0
    %2336 = vmatprep.mubr.f32.mxu0 0.0
    %2337 = vmatmul.mubr.f32.gmra.mxu0 %v2053
    %v2338 = vpop.f32.mrf.mxu0
    %v2339 = vadd.f32 0.0, %v2338
    %v2340 = vpop.f32.mrf.mxu0
    %v2341 = vadd.f32 0.0, %v2340
    %2342 = vdwg.mxu0
    %v2343 = vadd.f32 %v2126, %v2268
    %v2344 = vadd.f32 %v2128, %v2270
    %v2345 = vadd.f32 %v2197, %v2339
    %v2346 = vadd.f32 %v2199, %v2341
    %v2347 = vxor.u32 %v2343, 2147483648
    %v2348 = vmul.f32 %v2347, 1.442695
    %v2349 = vpow.pop %v2348
    %v2350 = vadd.f32 %v2349, 1.0
    %v2351 = vrcp.pop %v2350
    %v2352 = vmul.f32 1.0, %v2351
    %v2353 = vxor.u32 %v2344, 2147483648
    %v2354 = vmul.f32 %v2353, 1.442695
    %v2355 = vpow.pop %v2354
    %v2356 = vadd.f32 %v2355, 1.0
    %v2357 = vrcp.pop %v2356
    %v2358 = vmul.f32 1.0, %v2357
    %v2359 = vtanh.pop %v2345
    %v2360 = vxor.u32 %v2346, 2147483648
    %v2361 = vmul.f32 %v2360, 1.442695
    %v2362 = vpow.pop %v2361
    %v2363 = vadd.f32 %v2362, 1.0
    %v2364 = vrcp.pop %v2363
    %v2365 = vmul.f32 1.0, %v2364
    %v2366 = vmul.f32 %v2358, %v2051
    %v2367 = vmul.f32 %v2352, %v2359
    %v2368 = vadd.f32 %v2366, %v2367
    %v2369 = vtanh.pop %v2368
    %v2370 = vmul.f32 %v2365, %v2369
    %s2371 = scalar_lea.vmem %s0, 14
    %v2372 = vld [vmem:[%s2371] sm:$0x3]
    %v2374 = vsel %vm144, %v2372, 0
    %2376 = vmatprep.subr.mxu0 0.0
    %2377 = vmatpush1.msra.mxu0 0.0
    %2378 = vmatprep.subr.mxu0 0.0
    %2379 = vmatpush1.msra.mxu0 0.0
    %2380 = vmatprep.subr.mxu0 0.0
    %2381 = vmatpush1.msra.mxu0 0.0
    %2382 = vmatprep.subr.mxu0 0.0
    %2383 = vmatpush1.msra.mxu0 0.0
    %2384 = vmatprep.subr.mxu0 0.0
    %2385 = vmatpush1.msra.mxu0 0.0
    %2386 = vmatprep.subr.mxu0 0.0
    %2387 = vmatpush1.msra.mxu0 0.0
    %2388 = vmatprep.subr.mxu0 0.0
    %2389 = vmatpush1.msra.mxu0 0.0
    %2390 = vmatprep.subr.mxu0 0.0
    %2391 = vmatpush1.msra.mxu0 0.0
    %2392 = vmatprep.subr.mxu0 0.0
    %2393 = vmatpush1.msra.mxu0 0.0
    %2394 = vmatprep.subr.mxu0 0.0
    %2395 = vmatpush1.msra.mxu0 0.0
    %2396 = vmatprep.subr.mxu0 0.0
    %2397 = vmatpush1.msra.mxu0 0.0
    %2398 = vmatprep.subr.mxu0 0.0
    %2399 = vmatpush1.msra.mxu0 0.0
    %2400 = vmatprep.subr.mxu0 0.0
    %2401 = vmatpush1.msra.mxu0 0.0
    %2402 = vmatprep.subr.mxu0 0.0
    %2403 = vmatpush1.msra.mxu0 0.0
    %2404 = vmatprep.subr.mxu0 0.0
    %2405 = vmatpush1.msra.mxu0 0.0
    %2406 = vmatprep.subr.mxu0 %v151
    %2407 = vmatpush1.msra.mxu0 %v149
    %2408 = vmatprep.subr.mxu0 0.0
    %2409 = vmatpush2.msra.mxu0 0.0
    %2410 = vmatprep.subr.mxu0 0.0
    %2411 = vmatpush2.msra.mxu0 0.0
    %2412 = vmatprep.subr.mxu0 0.0
    %2413 = vmatpush2.msra.mxu0 0.0
    %2414 = vmatprep.subr.mxu0 0.0
    %2415 = vmatpush2.msra.mxu0 0.0
    %2416 = vmatprep.subr.mxu0 0.0
    %2417 = vmatpush2.msra.mxu0 0.0
    %2418 = vmatprep.subr.mxu0 0.0
    %2419 = vmatpush2.msra.mxu0 0.0
    %2420 = vmatprep.subr.mxu0 0.0
    %2421 = vmatpush2.msra.mxu0 0.0
    %2422 = vmatprep.subr.mxu0 0.0
    %2423 = vmatpush2.msra.mxu0 0.0
    %2424 = vmatprep.subr.mxu0 0.0
    %2425 = vmatpush2.msra.mxu0 0.0
    %2426 = vmatprep.subr.mxu0 0.0
    %2427 = vmatpush2.msra.mxu0 0.0
    %2428 = vmatprep.subr.mxu0 0.0
    %2429 = vmatpush2.msra.mxu0 0.0
    %2430 = vmatprep.subr.mxu0 0.0
    %2431 = vmatpush2.msra.mxu0 0.0
    %2432 = vmatprep.subr.mxu0 0.0
    %2433 = vmatpush2.msra.mxu0 0.0
    %2434 = vmatprep.subr.mxu0 0.0
    %2435 = vmatpush2.msra.mxu0 0.0
    %2436 = vmatprep.subr.mxu0 0.0
    %2437 = vmatpush2.msra.mxu0 0.0
    %2438 = vmatprep.subr.mxu0 0.0
    %2439 = vmatpush2.msra.mxu0 0.0
    %2440 = vmatprep.mubr.f32.mxu0 0.0
    %2441 = vmatmul.mubr.f32.gmra.mxu0 %v2374
    %v2442 = vpop.f32.mrf.mxu0
    %v2443 = vadd.f32 %v109, %v2442
    %v2444 = vpop.f32.mrf.mxu0
    %v2445 = vadd.f32 %v113, %v2444
    %2446 = vdwg.mxu0
    %2447 = vmatprep.subr.mxu0 0.0
    %2448 = vmatpush1.msra.mxu0 0.0
    %2449 = vmatprep.subr.mxu0 0.0
    %2450 = vmatpush1.msra.mxu0 0.0
    %2451 = vmatprep.subr.mxu0 0.0
    %2452 = vmatpush1.msra.mxu0 0.0
    %2453 = vmatprep.subr.mxu0 0.0
    %2454 = vmatpush1.msra.mxu0 0.0
    %2455 = vmatprep.subr.mxu0 0.0
    %2456 = vmatpush1.msra.mxu0 0.0
    %2457 = vmatprep.subr.mxu0 0.0
    %2458 = vmatpush1.msra.mxu0 0.0
    %2459 = vmatprep.subr.mxu0 0.0
    %2460 = vmatpush1.msra.mxu0 0.0
    %2461 = vmatprep.subr.mxu0 0.0
    %2462 = vmatpush1.msra.mxu0 0.0
    %2463 = vmatprep.subr.mxu0 0.0
    %2464 = vmatpush1.msra.mxu0 0.0
    %2465 = vmatprep.subr.mxu0 0.0
    %2466 = vmatpush1.msra.mxu0 0.0
    %2467 = vmatprep.subr.mxu0 0.0
    %2468 = vmatpush1.msra.mxu0 0.0
    %2469 = vmatprep.subr.mxu0 0.0
    %2470 = vmatpush1.msra.mxu0 0.0
    %2471 = vmatprep.subr.mxu0 0.0
    %2472 = vmatpush1.msra.mxu0 0.0
    %2473 = vmatprep.subr.mxu0 0.0
    %2474 = vmatpush1.msra.mxu0 0.0
    %2475 = vmatprep.subr.mxu0 0.0
    %2476 = vmatpush1.msra.mxu0 0.0
    %2477 = vmatprep.subr.mxu0 %v155
    %2478 = vmatpush1.msra.mxu0 %v153
    %2479 = vmatprep.subr.mxu0 0.0
    %2480 = vmatpush2.msra.mxu0 0.0
    %2481 = vmatprep.subr.mxu0 0.0
    %2482 = vmatpush2.msra.mxu0 0.0
    %2483 = vmatprep.subr.mxu0 0.0
    %2484 = vmatpush2.msra.mxu0 0.0
    %2485 = vmatprep.subr.mxu0 0.0
    %2486 = vmatpush2.msra.mxu0 0.0
    %2487 = vmatprep.subr.mxu0 0.0
    %2488 = vmatpush2.msra.mxu0 0.0
    %2489 = vmatprep.subr.mxu0 0.0
    %2490 = vmatpush2.msra.mxu0 0.0
    %2491 = vmatprep.subr.mxu0 0.0
    %2492 = vmatpush2.msra.mxu0 0.0
    %2493 = vmatprep.subr.mxu0 0.0
    %2494 = vmatpush2.msra.mxu0 0.0
    %2495 = vmatprep.subr.mxu0 0.0
    %2496 = vmatpush2.msra.mxu0 0.0
    %2497 = vmatprep.subr.mxu0 0.0
    %2498 = vmatpush2.msra.mxu0 0.0
    %2499 = vmatprep.subr.mxu0 0.0
    %2500 = vmatpush2.msra.mxu0 0.0
    %2501 = vmatprep.subr.mxu0 0.0
    %2502 = vmatpush2.msra.mxu0 0.0
    %2503 = vmatprep.subr.mxu0 0.0
    %2504 = vmatpush2.msra.mxu0 0.0
    %2505 = vmatprep.subr.mxu0 0.0
    %2506 = vmatpush2.msra.mxu0 0.0
    %2507 = vmatprep.subr.mxu0 0.0
    %2508 = vmatpush2.msra.mxu0 0.0
    %2509 = vmatprep.subr.mxu0 0.0
    %2510 = vmatpush2.msra.mxu0 0.0
    %2511 = vmatprep.mubr.f32.mxu0 0.0
    %2512 = vmatmul.mubr.f32.gmra.mxu0 %v2374
    %v2513 = vpop.f32.mrf.mxu0
    %v2514 = vadd.f32 %v117, %v2513
    %v2515 = vpop.f32.mrf.mxu0
    %v2516 = vadd.f32 %v121, %v2515
    %2517 = vdwg.mxu0
    %2518 = vmatprep.subr.mxu0 %v100
    %2519 = vmatpush1.msra.mxu0 %v99
    %2520 = vmatprep.subr.mxu0 %v96
    %2521 = vmatpush1.msra.mxu0 %v95
    %2522 = vmatprep.subr.mxu0 %v92
    %2523 = vmatpush1.msra.mxu0 %v91
    %2524 = vmatprep.subr.mxu0 %v88
    %2525 = vmatpush1.msra.mxu0 %v87
    %2526 = vmatprep.subr.mxu0 %v84
    %2527 = vmatpush1.msra.mxu0 %v83
    %2528 = vmatprep.subr.mxu0 %v80
    %2529 = vmatpush1.msra.mxu0 %v79
    %2530 = vmatprep.subr.mxu0 %v76
    %2531 = vmatpush1.msra.mxu0 %v75
    %2532 = vmatprep.subr.mxu0 %v72
    %2533 = vmatpush1.msra.mxu0 %v71
    %2534 = vmatprep.subr.mxu0 %v68
    %2535 = vmatpush1.msra.mxu0 %v67
    %2536 = vmatprep.subr.mxu0 %v64
    %2537 = vmatpush1.msra.mxu0 %v63
    %2538 = vmatprep.subr.mxu0 %v60
    %2539 = vmatpush1.msra.mxu0 %v59
    %2540 = vmatprep.subr.mxu0 %v56
    %2541 = vmatpush1.msra.mxu0 %v55
    %2542 = vmatprep.subr.mxu0 %v52
    %2543 = vmatpush1.msra.mxu0 %v51
    %2544 = vmatprep.subr.mxu0 %v48
    %2545 = vmatpush1.msra.mxu0 %v47
    %2546 = vmatprep.subr.mxu0 %v44
    %2547 = vmatpush1.msra.mxu0 %v43
    %2548 = vmatprep.subr.mxu0 %v40
    %2549 = vmatpush1.msra.mxu0 %v39
    %2550 = vmatprep.subr.mxu0 0.0
    %2551 = vmatpush2.msra.mxu0 0.0
    %2552 = vmatprep.subr.mxu0 0.0
    %2553 = vmatpush2.msra.mxu0 0.0
    %2554 = vmatprep.subr.mxu0 0.0
    %2555 = vmatpush2.msra.mxu0 0.0
    %2556 = vmatprep.subr.mxu0 0.0
    %2557 = vmatpush2.msra.mxu0 0.0
    %2558 = vmatprep.subr.mxu0 0.0
    %2559 = vmatpush2.msra.mxu0 0.0
    %2560 = vmatprep.subr.mxu0 0.0
    %2561 = vmatpush2.msra.mxu0 0.0
    %2562 = vmatprep.subr.mxu0 0.0
    %2563 = vmatpush2.msra.mxu0 0.0
    %2564 = vmatprep.subr.mxu0 0.0
    %2565 = vmatpush2.msra.mxu0 0.0
    %2566 = vmatprep.subr.mxu0 0.0
    %2567 = vmatpush2.msra.mxu0 0.0
    %2568 = vmatprep.subr.mxu0 0.0
    %2569 = vmatpush2.msra.mxu0 0.0
    %2570 = vmatprep.subr.mxu0 0.0
    %2571 = vmatpush2.msra.mxu0 0.0
    %2572 = vmatprep.subr.mxu0 0.0
    %2573 = vmatpush2.msra.mxu0 0.0
    %2574 = vmatprep.subr.mxu0 0.0
    %2575 = vmatpush2.msra.mxu0 0.0
    %2576 = vmatprep.subr.mxu0 0.0
    %2577 = vmatpush2.msra.mxu0 0.0
    %2578 = vmatprep.subr.mxu0 0.0
    %2579 = vmatpush2.msra.mxu0 0.0
    %2580 = vmatprep.subr.mxu0 0.0
    %2581 = vmatpush2.msra.mxu0 0.0
    %2582 = vmatprep.mubr.f32.mxu0 0.0
    %2583 = vmatmul.mubr.f32.gmra.mxu0 %v2370
    %v2584 = vpop.f32.mrf.mxu0
    %v2585 = vadd.f32 0.0, %v2584
    %v2586 = vpop.f32.mrf.mxu0
    %v2587 = vadd.f32 0.0, %v2586
    %2588 = vdwg.mxu0
    %2589 = vmatprep.subr.mxu0 %v102
    %2590 = vmatpush1.msra.mxu0 %v101
    %2591 = vmatprep.subr.mxu0 %v98
    %2592 = vmatpush1.msra.mxu0 %v97
    %2593 = vmatprep.subr.mxu0 %v94
    %2594 = vmatpush1.msra.mxu0 %v93
    %2595 = vmatprep.subr.mxu0 %v90
    %2596 = vmatpush1.msra.mxu0 %v89
    %2597 = vmatprep.subr.mxu0 %v86
    %2598 = vmatpush1.msra.mxu0 %v85
    %2599 = vmatprep.subr.mxu0 %v82
    %2600 = vmatpush1.msra.mxu0 %v81
    %2601 = vmatprep.subr.mxu0 %v78
    %2602 = vmatpush1.msra.mxu0 %v77
    %2603 = vmatprep.subr.mxu0 %v74
    %2604 = vmatpush1.msra.mxu0 %v73
    %2605 = vmatprep.subr.mxu0 %v70
    %2606 = vmatpush1.msra.mxu0 %v69
    %2607 = vmatprep.subr.mxu0 %v66
    %2608 = vmatpush1.msra.mxu0 %v65
    %2609 = vmatprep.subr.mxu0 %v62
    %2610 = vmatpush1.msra.mxu0 %v61
    %2611 = vmatprep.subr.mxu0 %v58
    %2612 = vmatpush1.msra.mxu0 %v57
    %2613 = vmatprep.subr.mxu0 %v54
    %2614 = vmatpush1.msra.mxu0 %v53
    %2615 = vmatprep.subr.mxu0 %v50
    %2616 = vmatpush1.msra.mxu0 %v49
    %2617 = vmatprep.subr.mxu0 %v46
    %2618 = vmatpush1.msra.mxu0 %v45
    %2619 = vmatprep.subr.mxu0 %v42
    %2620 = vmatpush1.msra.mxu0 %v41
    %2621 = vmatprep.subr.mxu0 0.0
    %2622 = vmatpush2.msra.mxu0 0.0
    %2623 = vmatprep.subr.mxu0 0.0
    %2624 = vmatpush2.msra.mxu0 0.0
    %2625 = vmatprep.subr.mxu0 0.0
    %2626 = vmatpush2.msra.mxu0 0.0
    %2627 = vmatprep.subr.mxu0 0.0
    %2628 = vmatpush2.msra.mxu0 0.0
    %2629 = vmatprep.subr.mxu0 0.0
    %2630 = vmatpush2.msra.mxu0 0.0
    %2631 = vmatprep.subr.mxu0 0.0
    %2632 = vmatpush2.msra.mxu0 0.0
    %2633 = vmatprep.subr.mxu0 0.0
    %2634 = vmatpush2.msra.mxu0 0.0
    %2635 = vmatprep.subr.mxu0 0.0
    %2636 = vmatpush2.msra.mxu0 0.0
    %2637 = vmatprep.subr.mxu0 0.0
    %2638 = vmatpush2.msra.mxu0 0.0
    %2639 = vmatprep.subr.mxu0 0.0
    %2640 = vmatpush2.msra.mxu0 0.0
    %2641 = vmatprep.subr.mxu0 0.0
    %2642 = vmatpush2.msra.mxu0 0.0
    %2643 = vmatprep.subr.mxu0 0.0
    %2644 = vmatpush2.msra.mxu0 0.0
    %2645 = vmatprep.subr.mxu0 0.0
    %2646 = vmatpush2.msra.mxu0 0.0
    %2647 = vmatprep.subr.mxu0 0.0
    %2648 = vmatpush2.msra.mxu0 0.0
    %2649 = vmatprep.subr.mxu0 0.0
    %2650 = vmatpush2.msra.mxu0 0.0
    %2651 = vmatprep.subr.mxu0 0.0
    %2652 = vmatpush2.msra.mxu0 0.0
    %2653 = vmatprep.mubr.f32.mxu0 0.0
    %2654 = vmatmul.mubr.f32.gmra.mxu0 %v2370
    %v2655 = vpop.f32.mrf.mxu0
    %v2656 = vadd.f32 0.0, %v2655
    %v2657 = vpop.f32.mrf.mxu0
    %v2658 = vadd.f32 0.0, %v2657
    %2659 = vdwg.mxu0
    %v2660 = vadd.f32 %v2443, %v2585
    %v2661 = vadd.f32 %v2445, %v2587
    %v2662 = vadd.f32 %v2514, %v2656
    %v2663 = vadd.f32 %v2516, %v2658
    %v2664 = vxor.u32 %v2660, 2147483648
    %v2665 = vmul.f32 %v2664, 1.442695
    %v2666 = vpow.pop %v2665
    %v2667 = vadd.f32 %v2666, 1.0
    %v2668 = vrcp.pop %v2667
    %v2669 = vmul.f32 1.0, %v2668
    %v2670 = vxor.u32 %v2661, 2147483648
    %v2671 = vmul.f32 %v2670, 1.442695
    %v2672 = vpow.pop %v2671
    %v2673 = vadd.f32 %v2672, 1.0
    %v2674 = vrcp.pop %v2673
    %v2675 = vmul.f32 1.0, %v2674
    %v2676 = vtanh.pop %v2662
    %v2677 = vxor.u32 %v2663, 2147483648
    %v2678 = vmul.f32 %v2677, 1.442695
    %v2679 = vpow.pop %v2678
    %v2680 = vadd.f32 %v2679, 1.0
    %v2681 = vrcp.pop %v2680
    %v2682 = vmul.f32 1.0, %v2681
    %v2683 = vmul.f32 %v2675, %v2368
    %v2684 = vmul.f32 %v2669, %v2676
    %v2685 = vadd.f32 %v2683, %v2684
    %v2686 = vtanh.pop %v2685
    %v2687 = vmul.f32 %v2682, %v2686
    %v2688 = vld [vmem:[%s4] sm:$0x1]
    %v2690 = vlaneseq
    %v2691 = vshrl.u32 %v2690, 7
    %v2692 = vsub.s32 0, %v2691
    %v2693 = vrot.slane %v2688, %v2692
    %v2695 = vmul.f32 %v2687, %v2693
    %v2696 = vsel %vm148, %v2695, 0.0
    %2697 = vadd.xlane.f32.xlu0 %v2696
    %v2698 = vpop.xlane.xlu0 %2697
    %s2699 = sld [smem:[#allocation2]]
    %v2700 = vstv %s2699
    %v2701 = vadd.f32 %v2698, %v2700
    %v2702 = vxor.u32 %v2701, 2147483648
    %v2703 = vmul.f32 %v2702, 1.442695
    %v2704 = vpow.pop %v2703
    %v2705 = vadd.f32 %v2704, 1.0
    %v2706 = vrcp.pop %v2705
    %v2707 = vmul.f32 1.0, %v2706
    %vm2708 = vcmask 1024
    %2709 = vst.msk [vmem:[%s6] sm:$0x3] %vm2708, %v2707
    // Predicated region
    $region30: #{slow_rnn_forward.1} parent=1 // pred_check
      _
    $region31: #{slow_rnn_forward.1} parent=1 // pred_check_branch
      %2711 = sbr.rel (0) target = $region33
    $region32: #{slow_rnn_forward.1} parent=1 // pred_region
      _
    $region33: #{slow_rnn_forward.1} parent=1 // pred_fallthru
      _
    // Predicated region
    $region34: #{slow_rnn_forward.1} parent=1 // pred_check
      _
    $region35: #{slow_rnn_forward.1} parent=1 // pred_check_branch
      %2713 = sbr.rel (0) target = $region37
    $region36: #{slow_rnn_forward.1} parent=1 // pred_region
      _
    $region37: #{slow_rnn_forward.1} parent=1 // pred_fallthru
      _
    %2714 = vsyncpa [#allocation4], 1

</llo_original>
